<compile_context>
chip_gen: v6e
topology: v6e:2x2x1
jax: 0.10.0
libtpu: 0.0.40
codegen_flags: <defaults>
</compile_context>

<pallas_src>
import jax
import jax.numpy as jnp
from jax import lax
from jax.experimental import pallas as pl
from jax.experimental.pallas import tpu as pltpu


def rnn_kernel(x_ref,
               w1x_ref, w1h_ref, b1_ref,
               w2x_ref, w2h_ref, b2_ref,
               y_ref):
    """Whole sequence in one kernel invocation; recurrence as an unrolled in-kernel loop."""
    S, B, _ = x_ref.shape
    H1 = w1x_ref.shape[1]
    H2 = w2x_ref.shape[1]

    # Load weights once; hoist bias broadcasts out of the (unrolled) time loop.
    w1x = w1x_ref[...]
    w1h = w1h_ref[...]
    w2x = w2x_ref[...]
    w2h = w2h_ref[...]
    b1 = jnp.broadcast_to(b1_ref[...], (B, H1)).astype(jnp.float32)
    b2 = jnp.broadcast_to(b2_ref[...], (B, H2)).astype(jnp.float32)

    def step(t, carry):
        h1, h2 = carry
        x = x_ref[t]                                   # (B, I) current timestep slice
        # layer 0: h1 = tanh( [x, h1] @ W1.T + b1 )
        z1 = (jnp.dot(x, w1x, preferred_element_type=jnp.float32)
              + jnp.dot(h1, w1h, preferred_element_type=jnp.float32)
              + b1)
        h1n = jnp.tanh(z1)
        # layer 1: h2 = tanh( [h1, h2] @ W2.T + b2 )
        z2 = (jnp.dot(h1n, w2x, preferred_element_type=jnp.float32)
              + jnp.dot(h2, w2h, preferred_element_type=jnp.float32)
              + b2)
        h2n = jnp.tanh(z2)
        return (h1n, h2n)

    # init_states: zeros
    h1_0 = jnp.zeros((B, H1), jnp.float32)
    h2_0 = jnp.zeros((B, H2), jnp.float32)

    # Fully unrolled so the LLO scheduler can overlap MXU pushes of step t+1/layer-1
    # with the EUP tanh / MRF pop of step t/layer-2.
    _, h2_last = lax.fori_loop(0, S, step, (h1_0, h2_0), unroll=True)

    # Single output write: last timestep's top-layer hidden state.
    y_ref[...] = h2_last.astype(y_ref.dtype)


def rnn_forward(Xt, params):
    """Xt: (S, B, I) float32. Returns (B, H2): last-timestep top-layer output."""
    S, B, I = Xt.shape
    w1x, w1h, b1, w2x, w2h, b2 = params
    H1 = w1x.shape[1]
    H2 = w2x.shape[1]

    return pl.pallas_call(
        rnn_kernel,
        out_shape=jax.ShapeDtypeStruct((B, H2), Xt.dtype),
        grid=(1,),
        in_specs=[
            pl.BlockSpec((S, B, I), lambda i: (0, 0, 0)),   # full sequence resident in VMEM
            pl.BlockSpec((I, H1), lambda i: (0, 0)),        # W1x
            pl.BlockSpec((H1, H1), lambda i: (0, 0)),       # W1h
            pl.BlockSpec((1, H1), lambda i: (0, 0)),        # b1
            pl.BlockSpec((H1, H2), lambda i: (0, 0)),       # W2x
            pl.BlockSpec((H2, H2), lambda i: (0, 0)),       # W2h
            pl.BlockSpec((1, H2), lambda i: (0, 0)),        # b2
        ],
        out_specs=pl.BlockSpec((B, H2), lambda i: (0, 0)),
        compiler_params=pltpu.CompilerParams(
            dimension_semantics=("arbitrary",),
        ),
    )(Xt, w1x, w1h, b1, w2x, w2h, b2)


def rnn_reference(Xt, params):
    """Pure-JAX reference of the same forward pass."""
    S, B, I = Xt.shape
    w1x, w1h, b1, w2x, w2h, b2 = params
    h1 = jnp.zeros((B, w1x.shape[1]), jnp.float32)
    h2 = jnp.zeros((B, w2x.shape[1]), jnp.float32)
    for t in range(S):
        x = Xt[t]
        h1 = jnp.tanh(x @ w1x + h1 @ w1h + b1)
        h2 = jnp.tanh(h1 @ w2x + h2 @ w2h + b2)
    return h2


def init_params(key, input_size, h1, h2):
    """Deterministic init matching reset_parameters: U(-1/sqrt(hs), 1/sqrt(hs))."""
    ks = jax.random.split(key, 6)
    s1 = 1.0 / jnp.sqrt(jnp.float32(h1))
    s2 = 1.0 / jnp.sqrt(jnp.float32(h2))
    w1x = jax.random.uniform(ks[0], (input_size, h1), jnp.float32, -s1, s1)
    w1h = jax.random.uniform(ks[1], (h1, h1), jnp.float32, -s1, s1)
    b1 = jax.random.uniform(ks[2], (1, h1), jnp.float32, -s1, s1)
    w2x = jax.random.uniform(ks[3], (h1, h2), jnp.float32, -s2, s2)
    w2h = jax.random.uniform(ks[4], (h2, h2), jnp.float32, -s2, s2)
    b2 = jax.random.uniform(ks[5], (1, h2), jnp.float32, -s2, s2)
    return (w1x, w1h, b1, w2x, w2h, b2)


if __name__ == "__main__":
    # small shapes: seq=8, batch=2, input=16, i2h_sizes=(32, 32)
    S, B, I = 8, 2, 16
    H1, H2 = 32, 32

    key = jax.random.PRNGKey(0)
    kx, kp = jax.random.split(key)
    Xt = jax.random.normal(kx, (S, B, I), dtype=jnp.float32)
    params = init_params(kp, I, H1, H2)

    y = rnn_forward(Xt, params)
    y = jax.block_until_ready(y)

    y_ref = rnn_reference(Xt, params)
    assert y.shape == (B, H2)
    assert jnp.allclose(y, y_ref, atol=1e-5, rtol=1e-5), "mismatch vs pure-JAX reference"

    # TODO(synk): i2o/o2o output heads, cell-state (LSTM-style) variants, dropout, and the
    # `future`/`reverse`/`return_sequences` options of the abstract base are not exercised;
    # this kernel implements the concrete i2h-only (Elman) forward path in eval mode.
    print("KERNEL_OK")
</pallas_src>

<mosaic_0001>
module attributes {stable_mosaic.version = 11 : i64} {
  func.func @rnn_kernel(%arg0: i32, %arg1: memref<8x2x16xf32, #tpu.memory_space<vmem>>, %arg2: memref<16x32xf32, #tpu.memory_space<vmem>>, %arg3: memref<32x32xf32, #tpu.memory_space<vmem>>, %arg4: memref<1x32xf32, #tpu.memory_space<vmem>>, %arg5: memref<32x32xf32, #tpu.memory_space<vmem>>, %arg6: memref<32x32xf32, #tpu.memory_space<vmem>>, %arg7: memref<1x32xf32, #tpu.memory_space<vmem>>, %arg8: memref<2x32xf32, #tpu.memory_space<vmem>>) attributes {dimension_semantics = [#tpu.dimension_semantics<arbitrary>], iteration_bounds = array<i64: 1>, scalar_prefetch = 0 : i64, scratch_operands = 0 : i64, tpu.core_type = #tpu.core_type<tc>, window_params = [{pipeline_mode = #tpu.pipeline_mode<synchronous>, transform_indices = @transform_0, window_bounds = array<i64: 8, 2, 16>}, {pipeline_mode = #tpu.pipeline_mode<synchronous>, transform_indices = @transform_1, window_bounds = array<i64: 16, 32>}, {pipeline_mode = #tpu.pipeline_mode<synchronous>, transform_indices = @transform_2, window_bounds = array<i64: 32, 32>}, {pipeline_mode = #tpu.pipeline_mode<synchronous>, transform_indices = @transform_3, window_bounds = array<i64: 1, 32>}, {pipeline_mode = #tpu.pipeline_mode<synchronous>, transform_indices = @transform_4, window_bounds = array<i64: 32, 32>}, {pipeline_mode = #tpu.pipeline_mode<synchronous>, transform_indices = @transform_5, window_bounds = array<i64: 32, 32>}, {pipeline_mode = #tpu.pipeline_mode<synchronous>, transform_indices = @transform_6, window_bounds = array<i64: 1, 32>}, {pipeline_mode = #tpu.pipeline_mode<synchronous>, transform_indices = @transform_7, window_bounds = array<i64: 2, 32>}]} {
    %c0 = arith.constant 0 : index
    %c0_0 = arith.constant 0 : index
    %0 = vector.load %arg2[%c0, %c0_0] : memref<16x32xf32, #tpu.memory_space<vmem>>, vector<16x32xf32>
    %c0_1 = arith.constant 0 : index
    %c0_2 = arith.constant 0 : index
    %1 = vector.load %arg3[%c0_1, %c0_2] : memref<32x32xf32, #tpu.memory_space<vmem>>, vector<32x32xf32>
    %c0_3 = arith.constant 0 : index
    %c0_4 = arith.constant 0 : index
    %2 = vector.load %arg5[%c0_3, %c0_4] : memref<32x32xf32, #tpu.memory_space<vmem>>, vector<32x32xf32>
    %c0_5 = arith.constant 0 : index
    %c0_6 = arith.constant 0 : index
    %3 = vector.load %arg6[%c0_5, %c0_6] : memref<32x32xf32, #tpu.memory_space<vmem>>, vector<32x32xf32>
    %c0_7 = arith.constant 0 : index
    %c0_8 = arith.constant 0 : index
    %4 = vector.load %arg4[%c0_7, %c0_8] : memref<1x32xf32, #tpu.memory_space<vmem>>, vector<1x32xf32>
    %5 = vector.shape_cast %4 : vector<1x32xf32> to vector<1x32xf32>
    %6 = vector.broadcast %5 : vector<1x32xf32> to vector<2x32xf32>
    %c0_9 = arith.constant 0 : index
    %c0_10 = arith.constant 0 : index
    %7 = vector.load %arg7[%c0_9, %c0_10] : memref<1x32xf32, #tpu.memory_space<vmem>>, vector<1x32xf32>
    %8 = vector.shape_cast %7 : vector<1x32xf32> to vector<1x32xf32>
    %9 = vector.broadcast %8 : vector<1x32xf32> to vector<2x32xf32>
    %cst = arith.constant 0.000000e+00 : f32
    %10 = vector.broadcast %cst : f32 to vector<2x32xf32>
    %cst_11 = arith.constant 0.000000e+00 : f32
    %11 = vector.broadcast %cst_11 : f32 to vector<2x32xf32>
    %c0_i32 = arith.constant 0 : i32
    %12 = arith.index_cast %c0_i32 : i32 to index
    %c0_12 = arith.constant 0 : index
    %c0_13 = arith.constant 0 : index
    %13 = vector.load %arg1[%12, %c0_12, %c0_13] : memref<8x2x16xf32, #tpu.memory_space<vmem>>, vector<1x2x16xf32>
    %14 = vector.shape_cast %13 : vector<1x2x16xf32> to vector<2x16xf32>
    %cst_14 = arith.constant dense<0.000000e+00> : vector<2x32xf32>
    %15 = tpu.matmul %14, %0, %cst_14 {dimension_numbers = #tpu.dot_dimension_numbers<[1], [0], [0], [1], [0, 0, 1, 1], [], []>} : vector<2x16xf32>, vector<16x32xf32>, vector<2x32xf32> -> vector<2x32xf32>
    %cst_15 = arith.constant dense<0.000000e+00> : vector<2x32xf32>
    %16 = tpu.matmul %10, %1, %cst_15 {dimension_numbers = #tpu.dot_dimension_numbers<[1], [0], [0], [1], [0, 0, 1, 1], [], []>} : vector<2x32xf32>, vector<32x32xf32>, vector<2x32xf32> -> vector<2x32xf32>
    %17 = arith.addf %15, %16 : vector<2x32xf32>
    %18 = arith.addf %17, %6 : vector<2x32xf32>
    %19 = math.tanh %18 : vector<2x32xf32>
    %cst_16 = arith.constant dense<0.000000e+00> : vector<2x32xf32>
    %20 = tpu.matmul %19, %2, %cst_16 {dimension_numbers = #tpu.dot_dimension_numbers<[1], [0], [0], [1], [0, 0, 1, 1], [], []>} : vector<2x32xf32>, vector<32x32xf32>, vector<2x32xf32> -> vector<2x32xf32>
    %cst_17 = arith.constant dense<0.000000e+00> : vector<2x32xf32>
    %21 = tpu.matmul %11, %3, %cst_17 {dimension_numbers = #tpu.dot_dimension_numbers<[1], [0], [0], [1], [0, 0, 1, 1], [], []>} : vector<2x32xf32>, vector<32x32xf32>, vector<2x32xf32> -> vector<2x32xf32>
    %22 = arith.addf %20, %21 : vector<2x32xf32>
    %23 = arith.addf %22, %9 : vector<2x32xf32>
    %24 = math.tanh %23 : vector<2x32xf32>
    %c1_i32 = arith.constant 1 : i32
    %25 = arith.index_cast %c1_i32 : i32 to index
    %c0_18 = arith.constant 0 : index
    %c0_19 = arith.constant 0 : index
    %26 = vector.load %arg1[%25, %c0_18, %c0_19] : memref<8x2x16xf32, #tpu.memory_space<vmem>>, vector<1x2x16xf32>
    %27 = vector.shape_cast %26 : vector<1x2x16xf32> to vector<2x16xf32>
    %cst_20 = arith.constant dense<0.000000e+00> : vector<2x32xf32>
    %28 = tpu.matmul %27, %0, %cst_20 {dimension_numbers = #tpu.dot_dimension_numbers<[1], [0], [0], [1], [0, 0, 1, 1], [], []>} : vector<2x16xf32>, vector<16x32xf32>, vector<2x32xf32> -> vector<2x32xf32>
    %cst_21 = arith.constant dense<0.000000e+00> : vector<2x32xf32>
    %29 = tpu.matmul %19, %1, %cst_21 {dimension_numbers = #tpu.dot_dimension_numbers<[1], [0], [0], [1], [0, 0, 1, 1], [], []>} : vector<2x32xf32>, vector<32x32xf32>, vector<2x32xf32> -> vector<2x32xf32>
    %30 = arith.addf %28, %29 : vector<2x32xf32>
    %31 = arith.addf %30, %6 : vector<2x32xf32>
    %32 = math.tanh %31 : vector<2x32xf32>
    %cst_22 = arith.constant dense<0.000000e+00> : vector<2x32xf32>
    %33 = tpu.matmul %32, %2, %cst_22 {dimension_numbers = #tpu.dot_dimension_numbers<[1], [0], [0], [1], [0, 0, 1, 1], [], []>} : vector<2x32xf32>, vector<32x32xf32>, vector<2x32xf32> -> vector<2x32xf32>
    %cst_23 = arith.constant dense<0.000000e+00> : vector<2x32xf32>
    %34 = tpu.matmul %24, %3, %cst_23 {dimension_numbers = #tpu.dot_dimension_numbers<[1], [0], [0], [1], [0, 0, 1, 1], [], []>} : vector<2x32xf32>, vector<32x32xf32>, vector<2x32xf32> -> vector<2x32xf32>
    %35 = arith.addf %33, %34 : vector<2x32xf32>
    %36 = arith.addf %35, %9 : vector<2x32xf32>
    %37 = math.tanh %36 : vector<2x32xf32>
    %c2_i32 = arith.constant 2 : i32
    %38 = arith.index_cast %c2_i32 : i32 to index
    %c0_24 = arith.constant 0 : index
    %c0_25 = arith.constant 0 : index
    %39 = vector.load %arg1[%38, %c0_24, %c0_25] : memref<8x2x16xf32, #tpu.memory_space<vmem>>, vector<1x2x16xf32>
    %40 = vector.shape_cast %39 : vector<1x2x16xf32> to vector<2x16xf32>
    %cst_26 = arith.constant dense<0.000000e+00> : vector<2x32xf32>
    %41 = tpu.matmul %40, %0, %cst_26 {dimension_numbers = #tpu.dot_dimension_numbers<[1], [0], [0], [1], [0, 0, 1, 1], [], []>} : vector<2x16xf32>, vector<16x32xf32>, vector<2x32xf32> -> vector<2x32xf32>
    %cst_27 = arith.constant dense<0.000000e+00> : vector<2x32xf32>
    %42 = tpu.matmul %32, %1, %cst_27 {dimension_numbers = #tpu.dot_dimension_numbers<[1], [0], [0], [1], [0, 0, 1, 1], [], []>} : vector<2x32xf32>, vector<32x32xf32>, vector<2x32xf32> -> vector<2x32xf32>
    %43 = arith.addf %41, %42 : vector<2x32xf32>
    %44 = arith.addf %43, %6 : vector<2x32xf32>
    %45 = math.tanh %44 : vector<2x32xf32>
    %cst_28 = arith.constant dense<0.000000e+00> : vector<2x32xf32>
    %46 = tpu.matmul %45, %2, %cst_28 {dimension_numbers = #tpu.dot_dimension_numbers<[1], [0], [0], [1], [0, 0, 1, 1], [], []>} : vector<2x32xf32>, vector<32x32xf32>, vector<2x32xf32> -> vector<2x32xf32>
    %cst_29 = arith.constant dense<0.000000e+00> : vector<2x32xf32>
    %47 = tpu.matmul %37, %3, %cst_29 {dimension_numbers = #tpu.dot_dimension_numbers<[1], [0], [0], [1], [0, 0, 1, 1], [], []>} : vector<2x32xf32>, vector<32x32xf32>, vector<2x32xf32> -> vector<2x32xf32>
    %48 = arith.addf %46, %47 : vector<2x32xf32>
    %49 = arith.addf %48, %9 : vector<2x32xf32>
    %50 = math.tanh %49 : vector<2x32xf32>
    %c3_i32 = arith.constant 3 : i32
    %51 = arith.index_cast %c3_i32 : i32 to index
    %c0_30 = arith.constant 0 : index
    %c0_31 = arith.constant 0 : index
    %52 = vector.load %arg1[%51, %c0_30, %c0_31] : memref<8x2x16xf32, #tpu.memory_space<vmem>>, vector<1x2x16xf32>
    %53 = vector.shape_cast %52 : vector<1x2x16xf32> to vector<2x16xf32>
    %cst_32 = arith.constant dense<0.000000e+00> : vector<2x32xf32>
    %54 = tpu.matmul %53, %0, %cst_32 {dimension_numbers = #tpu.dot_dimension_numbers<[1], [0], [0], [1], [0, 0, 1, 1], [], []>} : vector<2x16xf32>, vector<16x32xf32>, vector<2x32xf32> -> vector<2x32xf32>
    %cst_33 = arith.constant dense<0.000000e+00> : vector<2x32xf32>
    %55 = tpu.matmul %45, %1, %cst_33 {dimension_numbers = #tpu.dot_dimension_numbers<[1], [0], [0], [1], [0, 0, 1, 1], [], []>} : vector<2x32xf32>, vector<32x32xf32>, vector<2x32xf32> -> vector<2x32xf32>
    %56 = arith.addf %54, %55 : vector<2x32xf32>
    %57 = arith.addf %56, %6 : vector<2x32xf32>
    %58 = math.tanh %57 : vector<2x32xf32>
    %cst_34 = arith.constant dense<0.000000e+00> : vector<2x32xf32>
    %59 = tpu.matmul %58, %2, %cst_34 {dimension_numbers = #tpu.dot_dimension_numbers<[1], [0], [0], [1], [0, 0, 1, 1], [], []>} : vector<2x32xf32>, vector<32x32xf32>, vector<2x32xf32> -> vector<2x32xf32>
    %cst_35 = arith.constant dense<0.000000e+00> : vector<2x32xf32>
    %60 = tpu.matmul %50, %3, %cst_35 {dimension_numbers = #tpu.dot_dimension_numbers<[1], [0], [0], [1], [0, 0, 1, 1], [], []>} : vector<2x32xf32>, vector<32x32xf32>, vector<2x32xf32> -> vector<2x32xf32>
    %61 = arith.addf %59, %60 : vector<2x32xf32>
    %62 = arith.addf %61, %9 : vector<2x32xf32>
    %63 = math.tanh %62 : vector<2x32xf32>
    %c4_i32 = arith.constant 4 : i32
    %64 = arith.index_cast %c4_i32 : i32 to index
    %c0_36 = arith.constant 0 : index
    %c0_37 = arith.constant 0 : index
    %65 = vector.load %arg1[%64, %c0_36, %c0_37] : memref<8x2x16xf32, #tpu.memory_space<vmem>>, vector<1x2x16xf32>
    %66 = vector.shape_cast %65 : vector<1x2x16xf32> to vector<2x16xf32>
    %cst_38 = arith.constant dense<0.000000e+00> : vector<2x32xf32>
    %67 = tpu.matmul %66, %0, %cst_38 {dimension_numbers = #tpu.dot_dimension_numbers<[1], [0], [0], [1], [0, 0, 1, 1], [], []>} : vector<2x16xf32>, vector<16x32xf32>, vector<2x32xf32> -> vector<2x32xf32>
    %cst_39 = arith.constant dense<0.000000e+00> : vector<2x32xf32>
    %68 = tpu.matmul %58, %1, %cst_39 {dimension_numbers = #tpu.dot_dimension_numbers<[1], [0], [0], [1], [0, 0, 1, 1], [], []>} : vector<2x32xf32>, vector<32x32xf32>, vector<2x32xf32> -> vector<2x32xf32>
    %69 = arith.addf %67, %68 : vector<2x32xf32>
    %70 = arith.addf %69, %6 : vector<2x32xf32>
    %71 = math.tanh %70 : vector<2x32xf32>
    %cst_40 = arith.constant dense<0.000000e+00> : vector<2x32xf32>
    %72 = tpu.matmul %71, %2, %cst_40 {dimension_numbers = #tpu.dot_dimension_numbers<[1], [0], [0], [1], [0, 0, 1, 1], [], []>} : vector<2x32xf32>, vector<32x32xf32>, vector<2x32xf32> -> vector<2x32xf32>
    %cst_41 = arith.constant dense<0.000000e+00> : vector<2x32xf32>
    %73 = tpu.matmul %63, %3, %cst_41 {dimension_numbers = #tpu.dot_dimension_numbers<[1], [0], [0], [1], [0, 0, 1, 1], [], []>} : vector<2x32xf32>, vector<32x32xf32>, vector<2x32xf32> -> vector<2x32xf32>
    %74 = arith.addf %72, %73 : vector<2x32xf32>
    %75 = arith.addf %74, %9 : vector<2x32xf32>
    %76 = math.tanh %75 : vector<2x32xf32>
    %c5_i32 = arith.constant 5 : i32
    %77 = arith.index_cast %c5_i32 : i32 to index
    %c0_42 = arith.constant 0 : index
    %c0_43 = arith.constant 0 : index
    %78 = vector.load %arg1[%77, %c0_42, %c0_43] : memref<8x2x16xf32, #tpu.memory_space<vmem>>, vector<1x2x16xf32>
    %79 = vector.shape_cast %78 : vector<1x2x16xf32> to vector<2x16xf32>
    %cst_44 = arith.constant dense<0.000000e+00> : vector<2x32xf32>
    %80 = tpu.matmul %79, %0, %cst_44 {dimension_numbers = #tpu.dot_dimension_numbers<[1], [0], [0], [1], [0, 0, 1, 1], [], []>} : vector<2x16xf32>, vector<16x32xf32>, vector<2x32xf32> -> vector<2x32xf32>
    %cst_45 = arith.constant dense<0.000000e+00> : vector<2x32xf32>
    %81 = tpu.matmul %71, %1, %cst_45 {dimension_numbers = #tpu.dot_dimension_numbers<[1], [0], [0], [1], [0, 0, 1, 1], [], []>} : vector<2x32xf32>, vector<32x32xf32>, vector<2x32xf32> -> vector<2x32xf32>
    %82 = arith.addf %80, %81 : vector<2x32xf32>
    %83 = arith.addf %82, %6 : vector<2x32xf32>
    %84 = math.tanh %83 : vector<2x32xf32>
    %cst_46 = arith.constant dense<0.000000e+00> : vector<2x32xf32>
    %85 = tpu.matmul %84, %2, %cst_46 {dimension_numbers = #tpu.dot_dimension_numbers<[1], [0], [0], [1], [0, 0, 1, 1], [], []>} : vector<2x32xf32>, vector<32x32xf32>, vector<2x32xf32> -> vector<2x32xf32>
    %cst_47 = arith.constant dense<0.000000e+00> : vector<2x32xf32>
    %86 = tpu.matmul %76, %3, %cst_47 {dimension_numbers = #tpu.dot_dimension_numbers<[1], [0], [0], [1], [0, 0, 1, 1], [], []>} : vector<2x32xf32>, vector<32x32xf32>, vector<2x32xf32> -> vector<2x32xf32>
    %87 = arith.addf %85, %86 : vector<2x32xf32>
    %88 = arith.addf %87, %9 : vector<2x32xf32>
    %89 = math.tanh %88 : vector<2x32xf32>
    %c6_i32 = arith.constant 6 : i32
    %90 = arith.index_cast %c6_i32 : i32 to index
    %c0_48 = arith.constant 0 : index
    %c0_49 = arith.constant 0 : index
    %91 = vector.load %arg1[%90, %c0_48, %c0_49] : memref<8x2x16xf32, #tpu.memory_space<vmem>>, vector<1x2x16xf32>
    %92 = vector.shape_cast %91 : vector<1x2x16xf32> to vector<2x16xf32>
    %cst_50 = arith.constant dense<0.000000e+00> : vector<2x32xf32>
    %93 = tpu.matmul %92, %0, %cst_50 {dimension_numbers = #tpu.dot_dimension_numbers<[1], [0], [0], [1], [0, 0, 1, 1], [], []>} : vector<2x16xf32>, vector<16x32xf32>, vector<2x32xf32> -> vector<2x32xf32>
    %cst_51 = arith.constant dense<0.000000e+00> : vector<2x32xf32>
    %94 = tpu.matmul %84, %1, %cst_51 {dimension_numbers = #tpu.dot_dimension_numbers<[1], [0], [0], [1], [0, 0, 1, 1], [], []>} : vector<2x32xf32>, vector<32x32xf32>, vector<2x32xf32> -> vector<2x32xf32>
    %95 = arith.addf %93, %94 : vector<2x32xf32>
    %96 = arith.addf %95, %6 : vector<2x32xf32>
    %97 = math.tanh %96 : vector<2x32xf32>
    %cst_52 = arith.constant dense<0.000000e+00> : vector<2x32xf32>
    %98 = tpu.matmul %97, %2, %cst_52 {dimension_numbers = #tpu.dot_dimension_numbers<[1], [0], [0], [1], [0, 0, 1, 1], [], []>} : vector<2x32xf32>, vector<32x32xf32>, vector<2x32xf32> -> vector<2x32xf32>
    %cst_53 = arith.constant dense<0.000000e+00> : vector<2x32xf32>
    %99 = tpu.matmul %89, %3, %cst_53 {dimension_numbers = #tpu.dot_dimension_numbers<[1], [0], [0], [1], [0, 0, 1, 1], [], []>} : vector<2x32xf32>, vector<32x32xf32>, vector<2x32xf32> -> vector<2x32xf32>
    %100 = arith.addf %98, %99 : vector<2x32xf32>
    %101 = arith.addf %100, %9 : vector<2x32xf32>
    %102 = math.tanh %101 : vector<2x32xf32>
    %c7_i32 = arith.constant 7 : i32
    %103 = arith.index_cast %c7_i32 : i32 to index
    %c0_54 = arith.constant 0 : index
    %c0_55 = arith.constant 0 : index
    %104 = vector.load %arg1[%103, %c0_54, %c0_55] : memref<8x2x16xf32, #tpu.memory_space<vmem>>, vector<1x2x16xf32>
    %105 = vector.shape_cast %104 : vector<1x2x16xf32> to vector<2x16xf32>
    %cst_56 = arith.constant dense<0.000000e+00> : vector<2x32xf32>
    %106 = tpu.matmul %105, %0, %cst_56 {dimension_numbers = #tpu.dot_dimension_numbers<[1], [0], [0], [1], [0, 0, 1, 1], [], []>} : vector<2x16xf32>, vector<16x32xf32>, vector<2x32xf32> -> vector<2x32xf32>
    %cst_57 = arith.constant dense<0.000000e+00> : vector<2x32xf32>
    %107 = tpu.matmul %97, %1, %cst_57 {dimension_numbers = #tpu.dot_dimension_numbers<[1], [0], [0], [1], [0, 0, 1, 1], [], []>} : vector<2x32xf32>, vector<32x32xf32>, vector<2x32xf32> -> vector<2x32xf32>
    %108 = arith.addf %106, %107 : vector<2x32xf32>
    %109 = arith.addf %108, %6 : vector<2x32xf32>
    %110 = math.tanh %109 : vector<2x32xf32>
    %cst_58 = arith.constant dense<0.000000e+00> : vector<2x32xf32>
    %111 = tpu.matmul %110, %2, %cst_58 {dimension_numbers = #tpu.dot_dimension_numbers<[1], [0], [0], [1], [0, 0, 1, 1], [], []>} : vector<2x32xf32>, vector<32x32xf32>, vector<2x32xf32> -> vector<2x32xf32>
    %cst_59 = arith.constant dense<0.000000e+00> : vector<2x32xf32>
    %112 = tpu.matmul %102, %3, %cst_59 {dimension_numbers = #tpu.dot_dimension_numbers<[1], [0], [0], [1], [0, 0, 1, 1], [], []>} : vector<2x32xf32>, vector<32x32xf32>, vector<2x32xf32> -> vector<2x32xf32>
    %113 = arith.addf %111, %112 : vector<2x32xf32>
    %114 = arith.addf %113, %9 : vector<2x32xf32>
    %115 = math.tanh %114 : vector<2x32xf32>
    %c8_i32 = arith.constant 8 : i32
    %c0_60 = arith.constant 0 : index
    %c0_61 = arith.constant 0 : index
    %116 = vector.load %arg8[%c0_60, %c0_61] : memref<2x32xf32, #tpu.memory_space<vmem>>, vector<2x32xf32>
    tpu.vector_store %arg8[%c0_60, %c0_61], %115 {strides = array<i32>} : memref<2x32xf32, #tpu.memory_space<vmem>>, vector<2x32xf32>,
    return
  }
  func.func @transform_0(%arg0: i32) -> (i32, i32, i32) {
    %c0_i32 = arith.constant 0 : i32
    %c0_i32_0 = arith.constant 0 : i32
    %c0_i32_1 = arith.constant 0 : i32
    %c0_i32_2 = arith.constant 0 : i32
    return %c0_i32, %c0_i32_0, %c0_i32_1 : i32, i32, i32
  }
  func.func @transform_1(%arg0: i32) -> (i32, i32) {
    %c0_i32 = arith.constant 0 : i32
    %c0_i32_0 = arith.constant 0 : i32
    %c0_i32_1 = arith.constant 0 : i32
    return %c0_i32, %c0_i32_0 : i32, i32
  }
  func.func @transform_2(%arg0: i32) -> (i32, i32) {
    %c0_i32 = arith.constant 0 : i32
    %c0_i32_0 = arith.constant 0 : i32
    %c0_i32_1 = arith.constant 0 : i32
    return %c0_i32, %c0_i32_0 : i32, i32
  }
  func.func @transform_3(%arg0: i32) -> (i32, i32) {
    %c0_i32 = arith.constant 0 : i32
    %c0_i32_0 = arith.constant 0 : i32
    %c0_i32_1 = arith.constant 0 : i32
    return %c0_i32, %c0_i32_0 : i32, i32
  }
  func.func @transform_4(%arg0: i32) -> (i32, i32) {
    %c0_i32 = arith.constant 0 : i32
    %c0_i32_0 = arith.constant 0 : i32
    %c0_i32_1 = arith.constant 0 : i32
    return %c0_i32, %c0_i32_0 : i32, i32
  }
  func.func @transform_5(%arg0: i32) -> (i32, i32) {
    %c0_i32 = arith.constant 0 : i32
    %c0_i32_0 = arith.constant 0 : i32
    %c0_i32_1 = arith.constant 0 : i32
    return %c0_i32, %c0_i32_0 : i32, i32
  }
  func.func @transform_6(%arg0: i32) -> (i32, i32) {
    %c0_i32 = arith.constant 0 : i32
    %c0_i32_0 = arith.constant 0 : i32
    %c0_i32_1 = arith.constant 0 : i32
    return %c0_i32, %c0_i32_0 : i32, i32
  }
  func.func @transform_7(%arg0: i32) -> (i32, i32) {
    %c0_i32 = arith.constant 0 : i32
    %c0_i32_0 = arith.constant 0 : i32
    %c0_i32_1 = arith.constant 0 : i32
    return %c0_i32, %c0_i32_0 : i32, i32
  }
}

</mosaic_0001>

<llo_original>
// kernel: tpu_custom_call.1
$region0: #{tpu_custom_call.1}
  #allocation0 [shape = 'u32[]', space=smem, size = 0x4, offset = 0x4, fixed_abs, tag = 'smem constant byte address 0x4 - core index']
  #allocation1 [shape = 'u32[144,128]{1,0:T(1,128)}', space=vmem, size = 0x12000, scoped, tag = 'internal scratch']
  %s0 = inlined_call_operand.hbm [shape: f32[8,2,16], index: 0, kind: input, shape index: {}]
  %s1 = inlined_call_operand.hbm [shape: f32[16,32], index: 1, kind: input, shape index: {}]
  %s2 = inlined_call_operand.hbm [shape: f32[32,32], index: 2, kind: input, shape index: {}]
  %s3 = inlined_call_operand.vmem [shape: f32[1,32], index: 3, kind: input, shape index: {}]
  %s4 = inlined_call_operand.hbm [shape: f32[32,32], index: 4, kind: input, shape index: {}]
  %s5 = inlined_call_operand.hbm [shape: f32[32,32], index: 5, kind: input, shape index: {}]
  %s6 = inlined_call_operand.vmem [shape: f32[1,32], index: 6, kind: input, shape index: {}]
  %s7 = inlined_call_operand.hbm [shape: f32[2,32], index: 7, kind: output, shape index: {}]
  %s8 = sld [smem:[#allocation0]]
  $region58: #{tpu_custom_call.1} parent=0
    _
  %s10 = ssub.s32 1, %s8
  %s11 = scalar_select 0, %s10, %s8
  $region1: #{tpu_custom_call.1} parent=0
    #allocation2 [shape = 'u8[8192]{0}', space=vmem, size = 0x2000, scoped, tag = 'input window, operand 0, single buffered']
    #allocation3 [shape = 's32[1]{0}', space=sflag, size = 0x4, scoped, tag = 'scoped memory for tpu_custom_call.1']
    #allocation4 [shape = 's32[1]{0}', space=sflag, size = 0x4, scoped, tag = 'scoped memory for tpu_custom_call.1']
    #allocation5 [shape = 'u8[8192]{0}', space=vmem, size = 0x2000, scoped, tag = 'input window, operand 1, single buffered']
    #allocation6 [shape = 's32[1]{0}', space=sflag, size = 0x4, scoped, tag = 'scoped memory for tpu_custom_call.1']
    #allocation7 [shape = 'u8[16384]{0}', space=vmem, size = 0x4000, scoped, tag = 'input window, operand 2, single buffered']
    #allocation8 [shape = 'u8[16384]{0}', space=vmem, size = 0x4000, scoped, tag = 'input window, operand 4, single buffered']
    #allocation9 [shape = 's32[1]{0}', space=sflag, size = 0x4, scoped, tag = 'scoped memory for tpu_custom_call.1']
    #allocation10 [shape = 'u8[16384]{0}', space=vmem, size = 0x4000, scoped, tag = 'input window, operand 5, single buffered']
    #allocation11 [shape = 'u8[1024]{0}', space=vmem, size = 0x400, scoped, tag = 'output window, operand 0, single buffered']
    %12 = vsyncpa [#allocation3], 0
    %13 = vsyncpa [#allocation6], 0
    %14 = vsyncpa [#allocation9], 0
    %15 = vsyncpa [#allocation4], 0
    // Predicated region
    $region2: #{tpu_custom_call.1} parent=1 // pred_check
      _
    $region3: #{tpu_custom_call.1} parent=1 // pred_check_branch
      %17 = sbr.rel (0) target = $region5
    $region4: #{tpu_custom_call.1} parent=1 // pred_region
      %s19 = ssub.s32 256, 256
      %20 = vsyncadd [#allocation3], %s19
      %s21 = sshll.u32 [#allocation2], 4
      %s22 = int_to_ptr.vmem [resolvable:$true] %s21
      %27 = dma.hbm_to_vmem [thread:$0]  %s0, 256, %s22, [#allocation3], 32, 32, 2
    $region5: #{tpu_custom_call.1} parent=1 // pred_fallthru
      _
    // Predicated region
    $region6: #{tpu_custom_call.1} parent=1 // pred_check
      _
    $region7: #{tpu_custom_call.1} parent=1 // pred_check_branch
      %29 = sbr.rel (0) target = $region9
    $region8: #{tpu_custom_call.1} parent=1 // pred_region
      %s31 = ssub.s32 256, 256
      %32 = vsyncadd [#allocation6], %s31
      %s33 = sshll.u32 [#allocation5], 4
      %s34 = int_to_ptr.vmem [resolvable:$true] %s33
      %39 = dma.hbm_to_vmem [thread:$0]  %s1, 256, %s34, [#allocation6], 128, 128, 8
    $region9: #{tpu_custom_call.1} parent=1 // pred_fallthru
      _
    // Predicated region
    $region10: #{tpu_custom_call.1} parent=1 // pred_check
      _
    $region11: #{tpu_custom_call.1} parent=1 // pred_check_branch
      %41 = sbr.rel (0) target = $region13
    $region12: #{tpu_custom_call.1} parent=1 // pred_region
      %s43 = ssub.s32 512, 512
      %44 = vsyncadd [#allocation6], %s43
      %s45 = sshll.u32 [#allocation7], 4
      %s46 = int_to_ptr.vmem [resolvable:$true] %s45
      %51 = dma.hbm_to_vmem [thread:$0]  %s2, 512, %s46, [#allocation6], 128, 128, 8
    $region13: #{tpu_custom_call.1} parent=1 // pred_fallthru
      _
    // Predicated region
    $region14: #{tpu_custom_call.1} parent=1 // pred_check
      _
    $region15: #{tpu_custom_call.1} parent=1 // pred_check_branch
      %53 = sbr.rel (0) target = $region17
    $region16: #{tpu_custom_call.1} parent=1 // pred_region
      _
    $region17: #{tpu_custom_call.1} parent=1 // pred_fallthru
      _
    // Predicated region
    $region18: #{tpu_custom_call.1} parent=1 // pred_check
      _
    $region19: #{tpu_custom_call.1} parent=1 // pred_check_branch
      %55 = sbr.rel (0) target = $region21
    $region20: #{tpu_custom_call.1} parent=1 // pred_region
      %s57 = ssub.s32 512, 512
      %58 = vsyncadd [#allocation9], %s57
      %s59 = sshll.u32 [#allocation8], 4
      %s60 = int_to_ptr.vmem [resolvable:$true] %s59
      %65 = dma.hbm_to_vmem [thread:$0]  %s4, 512, %s60, [#allocation9], 128, 128, 8
    $region21: #{tpu_custom_call.1} parent=1 // pred_fallthru
      _
    // Predicated region
    $region22: #{tpu_custom_call.1} parent=1 // pred_check
      _
    $region23: #{tpu_custom_call.1} parent=1 // pred_check_branch
      %67 = sbr.rel (0) target = $region25
    $region24: #{tpu_custom_call.1} parent=1 // pred_region
      %s69 = ssub.s32 512, 512
      %70 = vsyncadd [#allocation9], %s69
      %s71 = sshll.u32 [#allocation10], 4
      %s72 = int_to_ptr.vmem [resolvable:$true] %s71
      %77 = dma.hbm_to_vmem [thread:$0]  %s5, 512, %s72, [#allocation9], 128, 128, 8
    $region25: #{tpu_custom_call.1} parent=1 // pred_fallthru
      _
    // Predicated region
    $region26: #{tpu_custom_call.1} parent=1 // pred_check
      _
    $region27: #{tpu_custom_call.1} parent=1 // pred_check_branch
      %79 = sbr.rel (0) target = $region29
    $region28: #{tpu_custom_call.1} parent=1 // pred_region
      _
    $region29: #{tpu_custom_call.1} parent=1 // pred_fallthru
      _
    // Predicated region
    $region30: #{tpu_custom_call.1} parent=1 // pred_check
      _
    $region31: #{tpu_custom_call.1} parent=1 // pred_check_branch
      %81 = sbr.rel (0) target = $region33
    $region32: #{tpu_custom_call.1} parent=1 // pred_region
      %82 = dma.done [#allocation3], 256
    $region33: #{tpu_custom_call.1} parent=1 // pred_fallthru
      _
    // Predicated region
    $region34: #{tpu_custom_call.1} parent=1 // pred_check
      _
    $region35: #{tpu_custom_call.1} parent=1 // pred_check_branch
      %84 = sbr.rel (0) target = $region37
    $region36: #{tpu_custom_call.1} parent=1 // pred_region
      %85 = dma.done [#allocation6], 256
    $region37: #{tpu_custom_call.1} parent=1 // pred_fallthru
      _
    // Predicated region
    $region38: #{tpu_custom_call.1} parent=1 // pred_check
      _
    $region39: #{tpu_custom_call.1} parent=1 // pred_check_branch
      %87 = sbr.rel (0) target = $region41
    $region40: #{tpu_custom_call.1} parent=1 // pred_region
      %88 = dma.done [#allocation6], 512
    $region41: #{tpu_custom_call.1} parent=1 // pred_fallthru
      _
    // Predicated region
    $region42: #{tpu_custom_call.1} parent=1 // pred_check
      _
    $region43: #{tpu_custom_call.1} parent=1 // pred_check_branch
      %90 = sbr.rel (0) target = $region45
    $region44: #{tpu_custom_call.1} parent=1 // pred_region
      %91 = dma.done [#allocation9], 512
    $region45: #{tpu_custom_call.1} parent=1 // pred_fallthru
      _
    // Predicated region
    $region46: #{tpu_custom_call.1} parent=1 // pred_check
      _
    $region47: #{tpu_custom_call.1} parent=1 // pred_check_branch
      %93 = sbr.rel (0) target = $region49
    $region48: #{tpu_custom_call.1} parent=1 // pred_region
      %94 = dma.done [#allocation9], 512
    $region49: #{tpu_custom_call.1} parent=1 // pred_fallthru
      _
    %v95 = vld [vmem:[#allocation5] sm:$0xff]
    %v96 = vld [vmem:[#allocation5 + $0x8] sm:$0xff]
    %v97 = vld [vmem:[#allocation7] sm:$0xff]
    %v98 = vld [vmem:[#allocation7 + $0x8] sm:$0xff]
    %v99 = vld [vmem:[#allocation7 + $0x10] sm:$0xff]
    %v100 = vld [vmem:[#allocation7 + $0x18] sm:$0xff]
    %v101 = vld [vmem:[#allocation8] sm:$0xff]
    %v102 = vld [vmem:[#allocation8 + $0x8] sm:$0xff]
    %v103 = vld [vmem:[#allocation8 + $0x10] sm:$0xff]
    %v104 = vld [vmem:[#allocation8 + $0x18] sm:$0xff]
    %v105 = vld [vmem:[#allocation10] sm:$0xff]
    %v106 = vld [vmem:[#allocation10 + $0x8] sm:$0xff]
    %v107 = vld [vmem:[#allocation10 + $0x10] sm:$0xff]
    %v108 = vld [vmem:[#allocation10 + $0x18] sm:$0xff]
    %v109 = vld [vmem:[%s3] sm:$0x1]
    %v111 = vlaneseq
    %v112 = vshrl.u32 %v111, 7
    %v113 = vsub.s32 0, %v112
    %v114 = vrot.slane %v109, %v113
    %v116 = vld [vmem:[%s6] sm:$0x1]
    %v118 = vlaneseq
    %v119 = vshrl.u32 %v118, 7
    %v120 = vsub.s32 0, %v119
    %v121 = vrot.slane %v116, %v120
    %v123 = vld [vmem:[#allocation2] sm:$0x3]
    %vm124 = vcmask 261120
    %v126 = vsel %vm124, 0.0, 0
    %128 = vmatprep.subr.mxu0 0.0
    %129 = vmatpush1.msra.mxu0 0.0
    %130 = vmatprep.subr.mxu0 0.0
    %131 = vmatpush1.msra.mxu0 0.0
    %132 = vmatprep.subr.mxu0 0.0
    %133 = vmatpush1.msra.mxu0 0.0
    %134 = vmatprep.subr.mxu0 0.0
    %135 = vmatpush1.msra.mxu0 0.0
    %136 = vmatprep.subr.mxu0 0.0
    %137 = vmatpush1.msra.mxu0 0.0
    %138 = vmatprep.subr.mxu0 0.0
    %139 = vmatpush1.msra.mxu0 0.0
    %140 = vmatprep.subr.mxu0 0.0
    %141 = vmatpush1.msra.mxu0 0.0
    %142 = vmatprep.subr.mxu0 0.0
    %143 = vmatpush1.msra.mxu0 0.0
    %144 = vmatprep.subr.mxu0 0.0
    %145 = vmatpush1.msra.mxu0 0.0
    %146 = vmatprep.subr.mxu0 0.0
    %147 = vmatpush1.msra.mxu0 0.0
    %148 = vmatprep.subr.mxu0 0.0
    %149 = vmatpush1.msra.mxu0 0.0
    %150 = vmatprep.subr.mxu0 0.0
    %151 = vmatpush1.msra.mxu0 0.0
    %152 = vmatprep.subr.mxu0 0.0
    %153 = vmatpush1.msra.mxu0 %v100
    %154 = vmatprep.subr.mxu0 0.0
    %155 = vmatpush1.msra.mxu0 %v99
    %156 = vmatprep.subr.mxu0 0.0
    %157 = vmatpush1.msra.mxu0 %v98
    %158 = vmatprep.subr.mxu0 0.0
    %159 = vmatpush1.msra.mxu0 %v97
    %160 = vmatprep.subr.mxu0 0.0
    %161 = vmatpush2.msra.mxu0 0.0
    %162 = vmatprep.subr.mxu0 0.0
    %163 = vmatpush2.msra.mxu0 0.0
    %164 = vmatprep.subr.mxu0 0.0
    %165 = vmatpush2.msra.mxu0 0.0
    %166 = vmatprep.subr.mxu0 0.0
    %167 = vmatpush2.msra.mxu0 0.0
    %168 = vmatprep.subr.mxu0 0.0
    %169 = vmatpush2.msra.mxu0 0.0
    %170 = vmatprep.subr.mxu0 0.0
    %171 = vmatpush2.msra.mxu0 0.0
    %172 = vmatprep.subr.mxu0 0.0
    %173 = vmatpush2.msra.mxu0 0.0
    %174 = vmatprep.subr.mxu0 0.0
    %175 = vmatpush2.msra.mxu0 0.0
    %176 = vmatprep.subr.mxu0 0.0
    %177 = vmatpush2.msra.mxu0 0.0
    %178 = vmatprep.subr.mxu0 0.0
    %179 = vmatpush2.msra.mxu0 0.0
    %180 = vmatprep.subr.mxu0 0.0
    %181 = vmatpush2.msra.mxu0 0.0
    %182 = vmatprep.subr.mxu0 0.0
    %183 = vmatpush2.msra.mxu0 0.0
    %184 = vmatprep.subr.mxu0 0.0
    %185 = vmatpush2.msra.mxu0 0.0
    %186 = vmatprep.subr.mxu0 0.0
    %187 = vmatpush2.msra.mxu0 0.0
    %188 = vmatprep.subr.mxu0 0.0
    %189 = vmatpush2.msra.mxu0 0.0
    %190 = vmatprep.subr.mxu0 0.0
    %191 = vmatpush2.msra.mxu0 0.0
    %192 = vmatprep.mubr.f32.mxu0 0.0
    %193 = vmatmul.mubr.f32.gmra.mxu0 %v126
    %v194 = vpop.f32.mrf.mxu0
    %v195 = vadd.f32 0.0, %v194
    %v196 = vpop.f32.mrf.mxu0
    %197 = vdwg.mxu0
    %vm198 = vcmask 130048
    %v200 = vsel %vm198, %v123, 0
    %202 = vmatprep.subr.mxu0 0.0
    %203 = vmatpush1.msra.mxu0 0.0
    %204 = vmatprep.subr.mxu0 0.0
    %205 = vmatpush1.msra.mxu0 0.0
    %206 = vmatprep.subr.mxu0 0.0
    %207 = vmatpush1.msra.mxu0 0.0
    %208 = vmatprep.subr.mxu0 0.0
    %209 = vmatpush1.msra.mxu0 0.0
    %210 = vmatprep.subr.mxu0 0.0
    %211 = vmatpush1.msra.mxu0 0.0
    %212 = vmatprep.subr.mxu0 0.0
    %213 = vmatpush1.msra.mxu0 0.0
    %214 = vmatprep.subr.mxu0 0.0
    %215 = vmatpush1.msra.mxu0 0.0
    %216 = vmatprep.subr.mxu0 0.0
    %217 = vmatpush1.msra.mxu0 0.0
    %218 = vmatprep.subr.mxu0 0.0
    %219 = vmatpush1.msra.mxu0 0.0
    %220 = vmatprep.subr.mxu0 0.0
    %221 = vmatpush1.msra.mxu0 0.0
    %222 = vmatprep.subr.mxu0 0.0
    %223 = vmatpush1.msra.mxu0 0.0
    %224 = vmatprep.subr.mxu0 0.0
    %225 = vmatpush1.msra.mxu0 0.0
    %226 = vmatprep.subr.mxu0 0.0
    %227 = vmatpush1.msra.mxu0 0.0
    %228 = vmatprep.subr.mxu0 0.0
    %229 = vmatpush1.msra.mxu0 0.0
    %230 = vmatprep.subr.mxu0 0.0
    %231 = vmatpush1.msra.mxu0 %v96
    %232 = vmatprep.subr.mxu0 0.0
    %233 = vmatpush1.msra.mxu0 %v95
    %234 = vmatprep.subr.mxu0 0.0
    %235 = vmatpush2.msra.mxu0 0.0
    %236 = vmatprep.subr.mxu0 0.0
    %237 = vmatpush2.msra.mxu0 0.0
    %238 = vmatprep.subr.mxu0 0.0
    %239 = vmatpush2.msra.mxu0 0.0
    %240 = vmatprep.subr.mxu0 0.0
    %241 = vmatpush2.msra.mxu0 0.0
    %242 = vmatprep.subr.mxu0 0.0
    %243 = vmatpush2.msra.mxu0 0.0
    %244 = vmatprep.subr.mxu0 0.0
    %245 = vmatpush2.msra.mxu0 0.0
    %246 = vmatprep.subr.mxu0 0.0
    %247 = vmatpush2.msra.mxu0 0.0
    %248 = vmatprep.subr.mxu0 0.0
    %249 = vmatpush2.msra.mxu0 0.0
    %250 = vmatprep.subr.mxu0 0.0
    %251 = vmatpush2.msra.mxu0 0.0
    %252 = vmatprep.subr.mxu0 0.0
    %253 = vmatpush2.msra.mxu0 0.0
    %254 = vmatprep.subr.mxu0 0.0
    %255 = vmatpush2.msra.mxu0 0.0
    %256 = vmatprep.subr.mxu0 0.0
    %257 = vmatpush2.msra.mxu0 0.0
    %258 = vmatprep.subr.mxu0 0.0
    %259 = vmatpush2.msra.mxu0 0.0
    %260 = vmatprep.subr.mxu0 0.0
    %261 = vmatpush2.msra.mxu0 0.0
    %262 = vmatprep.subr.mxu0 0.0
    %263 = vmatpush2.msra.mxu0 0.0
    %264 = vmatprep.subr.mxu0 0.0
    %265 = vmatpush2.msra.mxu0 0.0
    %266 = vmatprep.mubr.f32.mxu0 0.0
    %267 = vmatmul.mubr.f32.gmra.mxu0 %v200
    %v268 = vpop.f32.mrf.mxu0
    %v269 = vadd.f32 %v195, %v268
    %v270 = vpop.f32.mrf.mxu0
    %271 = vdwg.mxu0
    %v272 = vadd.f32 %v269, %v114
    %v273 = vtanh.pop %v272
    %274 = vmatprep.subr.mxu0 0.0
    %275 = vmatpush1.msra.mxu0 0.0
    %276 = vmatprep.subr.mxu0 0.0
    %277 = vmatpush1.msra.mxu0 0.0
    %278 = vmatprep.subr.mxu0 0.0
    %279 = vmatpush1.msra.mxu0 0.0
    %280 = vmatprep.subr.mxu0 0.0
    %281 = vmatpush1.msra.mxu0 0.0
    %282 = vmatprep.subr.mxu0 0.0
    %283 = vmatpush1.msra.mxu0 0.0
    %284 = vmatprep.subr.mxu0 0.0
    %285 = vmatpush1.msra.mxu0 0.0
    %286 = vmatprep.subr.mxu0 0.0
    %287 = vmatpush1.msra.mxu0 0.0
    %288 = vmatprep.subr.mxu0 0.0
    %289 = vmatpush1.msra.mxu0 0.0
    %290 = vmatprep.subr.mxu0 0.0
    %291 = vmatpush1.msra.mxu0 0.0
    %292 = vmatprep.subr.mxu0 0.0
    %293 = vmatpush1.msra.mxu0 0.0
    %294 = vmatprep.subr.mxu0 0.0
    %295 = vmatpush1.msra.mxu0 0.0
    %296 = vmatprep.subr.mxu0 0.0
    %297 = vmatpush1.msra.mxu0 0.0
    %298 = vmatprep.subr.mxu0 0.0
    %299 = vmatpush1.msra.mxu0 %v108
    %300 = vmatprep.subr.mxu0 0.0
    %301 = vmatpush1.msra.mxu0 %v107
    %302 = vmatprep.subr.mxu0 0.0
    %303 = vmatpush1.msra.mxu0 %v106
    %304 = vmatprep.subr.mxu0 0.0
    %305 = vmatpush1.msra.mxu0 %v105
    %306 = vmatprep.subr.mxu0 0.0
    %307 = vmatpush2.msra.mxu0 0.0
    %308 = vmatprep.subr.mxu0 0.0
    %309 = vmatpush2.msra.mxu0 0.0
    %310 = vmatprep.subr.mxu0 0.0
    %311 = vmatpush2.msra.mxu0 0.0
    %312 = vmatprep.subr.mxu0 0.0
    %313 = vmatpush2.msra.mxu0 0.0
    %314 = vmatprep.subr.mxu0 0.0
    %315 = vmatpush2.msra.mxu0 0.0
    %316 = vmatprep.subr.mxu0 0.0
    %317 = vmatpush2.msra.mxu0 0.0
    %318 = vmatprep.subr.mxu0 0.0
    %319 = vmatpush2.msra.mxu0 0.0
    %320 = vmatprep.subr.mxu0 0.0
    %321 = vmatpush2.msra.mxu0 0.0
    %322 = vmatprep.subr.mxu0 0.0
    %323 = vmatpush2.msra.mxu0 0.0
    %324 = vmatprep.subr.mxu0 0.0
    %325 = vmatpush2.msra.mxu0 0.0
    %326 = vmatprep.subr.mxu0 0.0
    %327 = vmatpush2.msra.mxu0 0.0
    %328 = vmatprep.subr.mxu0 0.0
    %329 = vmatpush2.msra.mxu0 0.0
    %330 = vmatprep.subr.mxu0 0.0
    %331 = vmatpush2.msra.mxu0 0.0
    %332 = vmatprep.subr.mxu0 0.0
    %333 = vmatpush2.msra.mxu0 0.0
    %334 = vmatprep.subr.mxu0 0.0
    %335 = vmatpush2.msra.mxu0 0.0
    %336 = vmatprep.subr.mxu0 0.0
    %337 = vmatpush2.msra.mxu0 0.0
    %338 = vmatprep.mubr.f32.mxu0 0.0
    %339 = vmatmul.mubr.f32.gmra.mxu0 %v126
    %v340 = vpop.f32.mrf.mxu0
    %v341 = vadd.f32 0.0, %v340
    %v342 = vpop.f32.mrf.mxu0
    %343 = vdwg.mxu0
    %v345 = vsel %vm124, %v273, 0
    %347 = vmatprep.subr.mxu0 0.0
    %348 = vmatpush1.msra.mxu0 0.0
    %349 = vmatprep.subr.mxu0 0.0
    %350 = vmatpush1.msra.mxu0 0.0
    %351 = vmatprep.subr.mxu0 0.0
    %352 = vmatpush1.msra.mxu0 0.0
    %353 = vmatprep.subr.mxu0 0.0
    %354 = vmatpush1.msra.mxu0 0.0
    %355 = vmatprep.subr.mxu0 0.0
    %356 = vmatpush1.msra.mxu0 0.0
    %357 = vmatprep.subr.mxu0 0.0
    %358 = vmatpush1.msra.mxu0 0.0
    %359 = vmatprep.subr.mxu0 0.0
    %360 = vmatpush1.msra.mxu0 0.0
    %361 = vmatprep.subr.mxu0 0.0
    %362 = vmatpush1.msra.mxu0 0.0
    %363 = vmatprep.subr.mxu0 0.0
    %364 = vmatpush1.msra.mxu0 0.0
    %365 = vmatprep.subr.mxu0 0.0
    %366 = vmatpush1.msra.mxu0 0.0
    %367 = vmatprep.subr.mxu0 0.0
    %368 = vmatpush1.msra.mxu0 0.0
    %369 = vmatprep.subr.mxu0 0.0
    %370 = vmatpush1.msra.mxu0 0.0
    %371 = vmatprep.subr.mxu0 0.0
    %372 = vmatpush1.msra.mxu0 %v104
    %373 = vmatprep.subr.mxu0 0.0
    %374 = vmatpush1.msra.mxu0 %v103
    %375 = vmatprep.subr.mxu0 0.0
    %376 = vmatpush1.msra.mxu0 %v102
    %377 = vmatprep.subr.mxu0 0.0
    %378 = vmatpush1.msra.mxu0 %v101
    %379 = vmatprep.subr.mxu0 0.0
    %380 = vmatpush2.msra.mxu0 0.0
    %381 = vmatprep.subr.mxu0 0.0
    %382 = vmatpush2.msra.mxu0 0.0
    %383 = vmatprep.subr.mxu0 0.0
    %384 = vmatpush2.msra.mxu0 0.0
    %385 = vmatprep.subr.mxu0 0.0
    %386 = vmatpush2.msra.mxu0 0.0
    %387 = vmatprep.subr.mxu0 0.0
    %388 = vmatpush2.msra.mxu0 0.0
    %389 = vmatprep.subr.mxu0 0.0
    %390 = vmatpush2.msra.mxu0 0.0
    %391 = vmatprep.subr.mxu0 0.0
    %392 = vmatpush2.msra.mxu0 0.0
    %393 = vmatprep.subr.mxu0 0.0
    %394 = vmatpush2.msra.mxu0 0.0
    %395 = vmatprep.subr.mxu0 0.0
    %396 = vmatpush2.msra.mxu0 0.0
    %397 = vmatprep.subr.mxu0 0.0
    %398 = vmatpush2.msra.mxu0 0.0
    %399 = vmatprep.subr.mxu0 0.0
    %400 = vmatpush2.msra.mxu0 0.0
    %401 = vmatprep.subr.mxu0 0.0
    %402 = vmatpush2.msra.mxu0 0.0
    %403 = vmatprep.subr.mxu0 0.0
    %404 = vmatpush2.msra.mxu0 0.0
    %405 = vmatprep.subr.mxu0 0.0
    %406 = vmatpush2.msra.mxu0 0.0
    %407 = vmatprep.subr.mxu0 0.0
    %408 = vmatpush2.msra.mxu0 0.0
    %409 = vmatprep.subr.mxu0 0.0
    %410 = vmatpush2.msra.mxu0 0.0
    %411 = vmatprep.mubr.f32.mxu0 0.0
    %412 = vmatmul.mubr.f32.gmra.mxu0 %v345
    %v413 = vpop.f32.mrf.mxu0
    %v414 = vadd.f32 %v341, %v413
    %v415 = vpop.f32.mrf.mxu0
    %416 = vdwg.mxu0
    %v417 = vadd.f32 %v414, %v121
    %v418 = vtanh.pop %v417
    %s419 = scalar_lea.vmem [#allocation2], 2
    %v420 = vld [vmem:[%s419] sm:$0x3]
    %421 = vmatprep.subr.mxu0 0.0
    %422 = vmatpush1.msra.mxu0 0.0
    %423 = vmatprep.subr.mxu0 0.0
    %424 = vmatpush1.msra.mxu0 0.0
    %425 = vmatprep.subr.mxu0 0.0
    %426 = vmatpush1.msra.mxu0 0.0
    %427 = vmatprep.subr.mxu0 0.0
    %428 = vmatpush1.msra.mxu0 0.0
    %429 = vmatprep.subr.mxu0 0.0
    %430 = vmatpush1.msra.mxu0 0.0
    %431 = vmatprep.subr.mxu0 0.0
    %432 = vmatpush1.msra.mxu0 0.0
    %433 = vmatprep.subr.mxu0 0.0
    %434 = vmatpush1.msra.mxu0 0.0
    %435 = vmatprep.subr.mxu0 0.0
    %436 = vmatpush1.msra.mxu0 0.0
    %437 = vmatprep.subr.mxu0 0.0
    %438 = vmatpush1.msra.mxu0 0.0
    %439 = vmatprep.subr.mxu0 0.0
    %440 = vmatpush1.msra.mxu0 0.0
    %441 = vmatprep.subr.mxu0 0.0
    %442 = vmatpush1.msra.mxu0 0.0
    %443 = vmatprep.subr.mxu0 0.0
    %444 = vmatpush1.msra.mxu0 0.0
    %445 = vmatprep.subr.mxu0 0.0
    %446 = vmatpush1.msra.mxu0 %v100
    %447 = vmatprep.subr.mxu0 0.0
    %448 = vmatpush1.msra.mxu0 %v99
    %449 = vmatprep.subr.mxu0 0.0
    %450 = vmatpush1.msra.mxu0 %v98
    %451 = vmatprep.subr.mxu0 0.0
    %452 = vmatpush1.msra.mxu0 %v97
    %453 = vmatprep.subr.mxu0 0.0
    %454 = vmatpush2.msra.mxu0 0.0
    %455 = vmatprep.subr.mxu0 0.0
    %456 = vmatpush2.msra.mxu0 0.0
    %457 = vmatprep.subr.mxu0 0.0
    %458 = vmatpush2.msra.mxu0 0.0
    %459 = vmatprep.subr.mxu0 0.0
    %460 = vmatpush2.msra.mxu0 0.0
    %461 = vmatprep.subr.mxu0 0.0
    %462 = vmatpush2.msra.mxu0 0.0
    %463 = vmatprep.subr.mxu0 0.0
    %464 = vmatpush2.msra.mxu0 0.0
    %465 = vmatprep.subr.mxu0 0.0
    %466 = vmatpush2.msra.mxu0 0.0
    %467 = vmatprep.subr.mxu0 0.0
    %468 = vmatpush2.msra.mxu0 0.0
    %469 = vmatprep.subr.mxu0 0.0
    %470 = vmatpush2.msra.mxu0 0.0
    %471 = vmatprep.subr.mxu0 0.0
    %472 = vmatpush2.msra.mxu0 0.0
    %473 = vmatprep.subr.mxu0 0.0
    %474 = vmatpush2.msra.mxu0 0.0
    %475 = vmatprep.subr.mxu0 0.0
    %476 = vmatpush2.msra.mxu0 0.0
    %477 = vmatprep.subr.mxu0 0.0
    %478 = vmatpush2.msra.mxu0 0.0
    %479 = vmatprep.subr.mxu0 0.0
    %480 = vmatpush2.msra.mxu0 0.0
    %481 = vmatprep.subr.mxu0 0.0
    %482 = vmatpush2.msra.mxu0 0.0
    %483 = vmatprep.subr.mxu0 0.0
    %484 = vmatpush2.msra.mxu0 0.0
    %485 = vmatprep.mubr.f32.mxu0 0.0
    %486 = vmatmul.mubr.f32.gmra.mxu0 %v345
    %v487 = vpop.f32.mrf.mxu0
    %v488 = vadd.f32 0.0, %v487
    %v489 = vpop.f32.mrf.mxu0
    %490 = vdwg.mxu0
    %v492 = vsel %vm198, %v420, 0
    %494 = vmatprep.subr.mxu0 0.0
    %495 = vmatpush1.msra.mxu0 0.0
    %496 = vmatprep.subr.mxu0 0.0
    %497 = vmatpush1.msra.mxu0 0.0
    %498 = vmatprep.subr.mxu0 0.0
    %499 = vmatpush1.msra.mxu0 0.0
    %500 = vmatprep.subr.mxu0 0.0
    %501 = vmatpush1.msra.mxu0 0.0
    %502 = vmatprep.subr.mxu0 0.0
    %503 = vmatpush1.msra.mxu0 0.0
    %504 = vmatprep.subr.mxu0 0.0
    %505 = vmatpush1.msra.mxu0 0.0
    %506 = vmatprep.subr.mxu0 0.0
    %507 = vmatpush1.msra.mxu0 0.0
    %508 = vmatprep.subr.mxu0 0.0
    %509 = vmatpush1.msra.mxu0 0.0
    %510 = vmatprep.subr.mxu0 0.0
    %511 = vmatpush1.msra.mxu0 0.0
    %512 = vmatprep.subr.mxu0 0.0
    %513 = vmatpush1.msra.mxu0 0.0
    %514 = vmatprep.subr.mxu0 0.0
    %515 = vmatpush1.msra.mxu0 0.0
    %516 = vmatprep.subr.mxu0 0.0
    %517 = vmatpush1.msra.mxu0 0.0
    %518 = vmatprep.subr.mxu0 0.0
    %519 = vmatpush1.msra.mxu0 0.0
    %520 = vmatprep.subr.mxu0 0.0
    %521 = vmatpush1.msra.mxu0 0.0
    %522 = vmatprep.subr.mxu0 0.0
    %523 = vmatpush1.msra.mxu0 %v96
    %524 = vmatprep.subr.mxu0 0.0
    %525 = vmatpush1.msra.mxu0 %v95
    %526 = vmatprep.subr.mxu0 0.0
    %527 = vmatpush2.msra.mxu0 0.0
    %528 = vmatprep.subr.mxu0 0.0
    %529 = vmatpush2.msra.mxu0 0.0
    %530 = vmatprep.subr.mxu0 0.0
    %531 = vmatpush2.msra.mxu0 0.0
    %532 = vmatprep.subr.mxu0 0.0
    %533 = vmatpush2.msra.mxu0 0.0
    %534 = vmatprep.subr.mxu0 0.0
    %535 = vmatpush2.msra.mxu0 0.0
    %536 = vmatprep.subr.mxu0 0.0
    %537 = vmatpush2.msra.mxu0 0.0
    %538 = vmatprep.subr.mxu0 0.0
    %539 = vmatpush2.msra.mxu0 0.0
    %540 = vmatprep.subr.mxu0 0.0
    %541 = vmatpush2.msra.mxu0 0.0
    %542 = vmatprep.subr.mxu0 0.0
    %543 = vmatpush2.msra.mxu0 0.0
    %544 = vmatprep.subr.mxu0 0.0
    %545 = vmatpush2.msra.mxu0 0.0
    %546 = vmatprep.subr.mxu0 0.0
    %547 = vmatpush2.msra.mxu0 0.0
    %548 = vmatprep.subr.mxu0 0.0
    %549 = vmatpush2.msra.mxu0 0.0
    %550 = vmatprep.subr.mxu0 0.0
    %551 = vmatpush2.msra.mxu0 0.0
    %552 = vmatprep.subr.mxu0 0.0
    %553 = vmatpush2.msra.mxu0 0.0
    %554 = vmatprep.subr.mxu0 0.0
    %555 = vmatpush2.msra.mxu0 0.0
    %556 = vmatprep.subr.mxu0 0.0
    %557 = vmatpush2.msra.mxu0 0.0
    %558 = vmatprep.mubr.f32.mxu0 0.0
    %559 = vmatmul.mubr.f32.gmra.mxu0 %v492
    %v560 = vpop.f32.mrf.mxu0
    %v561 = vadd.f32 %v488, %v560
    %v562 = vpop.f32.mrf.mxu0
    %563 = vdwg.mxu0
    %v564 = vadd.f32 %v561, %v114
    %v565 = vtanh.pop %v564
    %v567 = vsel %vm124, %v418, 0
    %569 = vmatprep.subr.mxu0 0.0
    %570 = vmatpush1.msra.mxu0 0.0
    %571 = vmatprep.subr.mxu0 0.0
    %572 = vmatpush1.msra.mxu0 0.0
    %573 = vmatprep.subr.mxu0 0.0
    %574 = vmatpush1.msra.mxu0 0.0
    %575 = vmatprep.subr.mxu0 0.0
    %576 = vmatpush1.msra.mxu0 0.0
    %577 = vmatprep.subr.mxu0 0.0
    %578 = vmatpush1.msra.mxu0 0.0
    %579 = vmatprep.subr.mxu0 0.0
    %580 = vmatpush1.msra.mxu0 0.0
    %581 = vmatprep.subr.mxu0 0.0
    %582 = vmatpush1.msra.mxu0 0.0
    %583 = vmatprep.subr.mxu0 0.0
    %584 = vmatpush1.msra.mxu0 0.0
    %585 = vmatprep.subr.mxu0 0.0
    %586 = vmatpush1.msra.mxu0 0.0
    %587 = vmatprep.subr.mxu0 0.0
    %588 = vmatpush1.msra.mxu0 0.0
    %589 = vmatprep.subr.mxu0 0.0
    %590 = vmatpush1.msra.mxu0 0.0
    %591 = vmatprep.subr.mxu0 0.0
    %592 = vmatpush1.msra.mxu0 0.0
    %593 = vmatprep.subr.mxu0 0.0
    %594 = vmatpush1.msra.mxu0 %v108
    %595 = vmatprep.subr.mxu0 0.0
    %596 = vmatpush1.msra.mxu0 %v107
    %597 = vmatprep.subr.mxu0 0.0
    %598 = vmatpush1.msra.mxu0 %v106
    %599 = vmatprep.subr.mxu0 0.0
    %600 = vmatpush1.msra.mxu0 %v105
    %601 = vmatprep.subr.mxu0 0.0
    %602 = vmatpush2.msra.mxu0 0.0
    %603 = vmatprep.subr.mxu0 0.0
    %604 = vmatpush2.msra.mxu0 0.0
    %605 = vmatprep.subr.mxu0 0.0
    %606 = vmatpush2.msra.mxu0 0.0
    %607 = vmatprep.subr.mxu0 0.0
    %608 = vmatpush2.msra.mxu0 0.0
    %609 = vmatprep.subr.mxu0 0.0
    %610 = vmatpush2.msra.mxu0 0.0
    %611 = vmatprep.subr.mxu0 0.0
    %612 = vmatpush2.msra.mxu0 0.0
    %613 = vmatprep.subr.mxu0 0.0
    %614 = vmatpush2.msra.mxu0 0.0
    %615 = vmatprep.subr.mxu0 0.0
    %616 = vmatpush2.msra.mxu0 0.0
    %617 = vmatprep.subr.mxu0 0.0
    %618 = vmatpush2.msra.mxu0 0.0
    %619 = vmatprep.subr.mxu0 0.0
    %620 = vmatpush2.msra.mxu0 0.0
    %621 = vmatprep.subr.mxu0 0.0
    %622 = vmatpush2.msra.mxu0 0.0
    %623 = vmatprep.subr.mxu0 0.0
    %624 = vmatpush2.msra.mxu0 0.0
    %625 = vmatprep.subr.mxu0 0.0
    %626 = vmatpush2.msra.mxu0 0.0
    %627 = vmatprep.subr.mxu0 0.0
    %628 = vmatpush2.msra.mxu0 0.0
    %629 = vmatprep.subr.mxu0 0.0
    %630 = vmatpush2.msra.mxu0 0.0
    %631 = vmatprep.subr.mxu0 0.0
    %632 = vmatpush2.msra.mxu0 0.0
    %633 = vmatprep.mubr.f32.mxu0 0.0
    %634 = vmatmul.mubr.f32.gmra.mxu0 %v567
    %v635 = vpop.f32.mrf.mxu0
    %v636 = vadd.f32 0.0, %v635
    %v637 = vpop.f32.mrf.mxu0
    %638 = vdwg.mxu0
    %v640 = vsel %vm124, %v565, 0
    %642 = vmatprep.subr.mxu0 0.0
    %643 = vmatpush1.msra.mxu0 0.0
    %644 = vmatprep.subr.mxu0 0.0
    %645 = vmatpush1.msra.mxu0 0.0
    %646 = vmatprep.subr.mxu0 0.0
    %647 = vmatpush1.msra.mxu0 0.0
    %648 = vmatprep.subr.mxu0 0.0
    %649 = vmatpush1.msra.mxu0 0.0
    %650 = vmatprep.subr.mxu0 0.0
    %651 = vmatpush1.msra.mxu0 0.0
    %652 = vmatprep.subr.mxu0 0.0
    %653 = vmatpush1.msra.mxu0 0.0
    %654 = vmatprep.subr.mxu0 0.0
    %655 = vmatpush1.msra.mxu0 0.0
    %656 = vmatprep.subr.mxu0 0.0
    %657 = vmatpush1.msra.mxu0 0.0
    %658 = vmatprep.subr.mxu0 0.0
    %659 = vmatpush1.msra.mxu0 0.0
    %660 = vmatprep.subr.mxu0 0.0
    %661 = vmatpush1.msra.mxu0 0.0
    %662 = vmatprep.subr.mxu0 0.0
    %663 = vmatpush1.msra.mxu0 0.0
    %664 = vmatprep.subr.mxu0 0.0
    %665 = vmatpush1.msra.mxu0 0.0
    %666 = vmatprep.subr.mxu0 0.0
    %667 = vmatpush1.msra.mxu0 %v104
    %668 = vmatprep.subr.mxu0 0.0
    %669 = vmatpush1.msra.mxu0 %v103
    %670 = vmatprep.subr.mxu0 0.0
    %671 = vmatpush1.msra.mxu0 %v102
    %672 = vmatprep.subr.mxu0 0.0
    %673 = vmatpush1.msra.mxu0 %v101
    %674 = vmatprep.subr.mxu0 0.0
    %675 = vmatpush2.msra.mxu0 0.0
    %676 = vmatprep.subr.mxu0 0.0
    %677 = vmatpush2.msra.mxu0 0.0
    %678 = vmatprep.subr.mxu0 0.0
    %679 = vmatpush2.msra.mxu0 0.0
    %680 = vmatprep.subr.mxu0 0.0
    %681 = vmatpush2.msra.mxu0 0.0
    %682 = vmatprep.subr.mxu0 0.0
    %683 = vmatpush2.msra.mxu0 0.0
    %684 = vmatprep.subr.mxu0 0.0
    %685 = vmatpush2.msra.mxu0 0.0
    %686 = vmatprep.subr.mxu0 0.0
    %687 = vmatpush2.msra.mxu0 0.0
    %688 = vmatprep.subr.mxu0 0.0
    %689 = vmatpush2.msra.mxu0 0.0
    %690 = vmatprep.subr.mxu0 0.0
    %691 = vmatpush2.msra.mxu0 0.0
    %692 = vmatprep.subr.mxu0 0.0
    %693 = vmatpush2.msra.mxu0 0.0
    %694 = vmatprep.subr.mxu0 0.0
    %695 = vmatpush2.msra.mxu0 0.0
    %696 = vmatprep.subr.mxu0 0.0
    %697 = vmatpush2.msra.mxu0 0.0
    %698 = vmatprep.subr.mxu0 0.0
    %699 = vmatpush2.msra.mxu0 0.0
    %700 = vmatprep.subr.mxu0 0.0
    %701 = vmatpush2.msra.mxu0 0.0
    %702 = vmatprep.subr.mxu0 0.0
    %703 = vmatpush2.msra.mxu0 0.0
    %704 = vmatprep.subr.mxu0 0.0
    %705 = vmatpush2.msra.mxu0 0.0
    %706 = vmatprep.mubr.f32.mxu0 0.0
    %707 = vmatmul.mubr.f32.gmra.mxu0 %v640
    %v708 = vpop.f32.mrf.mxu0
    %v709 = vadd.f32 %v636, %v708
    %v710 = vpop.f32.mrf.mxu0
    %711 = vdwg.mxu0
    %v712 = vadd.f32 %v709, %v121
    %v713 = vtanh.pop %v712
    %s714 = scalar_lea.vmem [#allocation2], 4
    %v715 = vld [vmem:[%s714] sm:$0x3]
    %716 = vmatprep.subr.mxu0 0.0
    %717 = vmatpush1.msra.mxu0 0.0
    %718 = vmatprep.subr.mxu0 0.0
    %719 = vmatpush1.msra.mxu0 0.0
    %720 = vmatprep.subr.mxu0 0.0
    %721 = vmatpush1.msra.mxu0 0.0
    %722 = vmatprep.subr.mxu0 0.0
    %723 = vmatpush1.msra.mxu0 0.0
    %724 = vmatprep.subr.mxu0 0.0
    %725 = vmatpush1.msra.mxu0 0.0
    %726 = vmatprep.subr.mxu0 0.0
    %727 = vmatpush1.msra.mxu0 0.0
    %728 = vmatprep.subr.mxu0 0.0
    %729 = vmatpush1.msra.mxu0 0.0
    %730 = vmatprep.subr.mxu0 0.0
    %731 = vmatpush1.msra.mxu0 0.0
    %732 = vmatprep.subr.mxu0 0.0
    %733 = vmatpush1.msra.mxu0 0.0
    %734 = vmatprep.subr.mxu0 0.0
    %735 = vmatpush1.msra.mxu0 0.0
    %736 = vmatprep.subr.mxu0 0.0
    %737 = vmatpush1.msra.mxu0 0.0
    %738 = vmatprep.subr.mxu0 0.0
    %739 = vmatpush1.msra.mxu0 0.0
    %740 = vmatprep.subr.mxu0 0.0
    %741 = vmatpush1.msra.mxu0 %v100
    %742 = vmatprep.subr.mxu0 0.0
    %743 = vmatpush1.msra.mxu0 %v99
    %744 = vmatprep.subr.mxu0 0.0
    %745 = vmatpush1.msra.mxu0 %v98
    %746 = vmatprep.subr.mxu0 0.0
    %747 = vmatpush1.msra.mxu0 %v97
    %748 = vmatprep.subr.mxu0 0.0
    %749 = vmatpush2.msra.mxu0 0.0
    %750 = vmatprep.subr.mxu0 0.0
    %751 = vmatpush2.msra.mxu0 0.0
    %752 = vmatprep.subr.mxu0 0.0
    %753 = vmatpush2.msra.mxu0 0.0
    %754 = vmatprep.subr.mxu0 0.0
    %755 = vmatpush2.msra.mxu0 0.0
    %756 = vmatprep.subr.mxu0 0.0
    %757 = vmatpush2.msra.mxu0 0.0
    %758 = vmatprep.subr.mxu0 0.0
    %759 = vmatpush2.msra.mxu0 0.0
    %760 = vmatprep.subr.mxu0 0.0
    %761 = vmatpush2.msra.mxu0 0.0
    %762 = vmatprep.subr.mxu0 0.0
    %763 = vmatpush2.msra.mxu0 0.0
    %764 = vmatprep.subr.mxu0 0.0
    %765 = vmatpush2.msra.mxu0 0.0
    %766 = vmatprep.subr.mxu0 0.0
    %767 = vmatpush2.msra.mxu0 0.0
    %768 = vmatprep.subr.mxu0 0.0
    %769 = vmatpush2.msra.mxu0 0.0
    %770 = vmatprep.subr.mxu0 0.0
    %771 = vmatpush2.msra.mxu0 0.0
    %772 = vmatprep.subr.mxu0 0.0
    %773 = vmatpush2.msra.mxu0 0.0
    %774 = vmatprep.subr.mxu0 0.0
    %775 = vmatpush2.msra.mxu0 0.0
    %776 = vmatprep.subr.mxu0 0.0
    %777 = vmatpush2.msra.mxu0 0.0
    %778 = vmatprep.subr.mxu0 0.0
    %779 = vmatpush2.msra.mxu0 0.0
    %780 = vmatprep.mubr.f32.mxu0 0.0
    %781 = vmatmul.mubr.f32.gmra.mxu0 %v640
    %v782 = vpop.f32.mrf.mxu0
    %v783 = vadd.f32 0.0, %v782
    %v784 = vpop.f32.mrf.mxu0
    %785 = vdwg.mxu0
    %v787 = vsel %vm198, %v715, 0
    %789 = vmatprep.subr.mxu0 0.0
    %790 = vmatpush1.msra.mxu0 0.0
    %791 = vmatprep.subr.mxu0 0.0
    %792 = vmatpush1.msra.mxu0 0.0
    %793 = vmatprep.subr.mxu0 0.0
    %794 = vmatpush1.msra.mxu0 0.0
    %795 = vmatprep.subr.mxu0 0.0
    %796 = vmatpush1.msra.mxu0 0.0
    %797 = vmatprep.subr.mxu0 0.0
    %798 = vmatpush1.msra.mxu0 0.0
    %799 = vmatprep.subr.mxu0 0.0
    %800 = vmatpush1.msra.mxu0 0.0
    %801 = vmatprep.subr.mxu0 0.0
    %802 = vmatpush1.msra.mxu0 0.0
    %803 = vmatprep.subr.mxu0 0.0
    %804 = vmatpush1.msra.mxu0 0.0
    %805 = vmatprep.subr.mxu0 0.0
    %806 = vmatpush1.msra.mxu0 0.0
    %807 = vmatprep.subr.mxu0 0.0
    %808 = vmatpush1.msra.mxu0 0.0
    %809 = vmatprep.subr.mxu0 0.0
    %810 = vmatpush1.msra.mxu0 0.0
    %811 = vmatprep.subr.mxu0 0.0
    %812 = vmatpush1.msra.mxu0 0.0
    %813 = vmatprep.subr.mxu0 0.0
    %814 = vmatpush1.msra.mxu0 0.0
    %815 = vmatprep.subr.mxu0 0.0
    %816 = vmatpush1.msra.mxu0 0.0
    %817 = vmatprep.subr.mxu0 0.0
    %818 = vmatpush1.msra.mxu0 %v96
    %819 = vmatprep.subr.mxu0 0.0
    %820 = vmatpush1.msra.mxu0 %v95
    %821 = vmatprep.subr.mxu0 0.0
    %822 = vmatpush2.msra.mxu0 0.0
    %823 = vmatprep.subr.mxu0 0.0
    %824 = vmatpush2.msra.mxu0 0.0
    %825 = vmatprep.subr.mxu0 0.0
    %826 = vmatpush2.msra.mxu0 0.0
    %827 = vmatprep.subr.mxu0 0.0
    %828 = vmatpush2.msra.mxu0 0.0
    %829 = vmatprep.subr.mxu0 0.0
    %830 = vmatpush2.msra.mxu0 0.0
    %831 = vmatprep.subr.mxu0 0.0
    %832 = vmatpush2.msra.mxu0 0.0
    %833 = vmatprep.subr.mxu0 0.0
    %834 = vmatpush2.msra.mxu0 0.0
    %835 = vmatprep.subr.mxu0 0.0
    %836 = vmatpush2.msra.mxu0 0.0
    %837 = vmatprep.subr.mxu0 0.0
    %838 = vmatpush2.msra.mxu0 0.0
    %839 = vmatprep.subr.mxu0 0.0
    %840 = vmatpush2.msra.mxu0 0.0
    %841 = vmatprep.subr.mxu0 0.0
    %842 = vmatpush2.msra.mxu0 0.0
    %843 = vmatprep.subr.mxu0 0.0
    %844 = vmatpush2.msra.mxu0 0.0
    %845 = vmatprep.subr.mxu0 0.0
    %846 = vmatpush2.msra.mxu0 0.0
    %847 = vmatprep.subr.mxu0 0.0
    %848 = vmatpush2.msra.mxu0 0.0
    %849 = vmatprep.subr.mxu0 0.0
    %850 = vmatpush2.msra.mxu0 0.0
    %851 = vmatprep.subr.mxu0 0.0
    %852 = vmatpush2.msra.mxu0 0.0
    %853 = vmatprep.mubr.f32.mxu0 0.0
    %854 = vmatmul.mubr.f32.gmra.mxu0 %v787
    %v855 = vpop.f32.mrf.mxu0
    %v856 = vadd.f32 %v783, %v855
    %v857 = vpop.f32.mrf.mxu0
    %858 = vdwg.mxu0
    %v859 = vadd.f32 %v856, %v114
    %v860 = vtanh.pop %v859
    %v862 = vsel %vm124, %v713, 0
    %864 = vmatprep.subr.mxu0 0.0
    %865 = vmatpush1.msra.mxu0 0.0
    %866 = vmatprep.subr.mxu0 0.0
    %867 = vmatpush1.msra.mxu0 0.0
    %868 = vmatprep.subr.mxu0 0.0
    %869 = vmatpush1.msra.mxu0 0.0
    %870 = vmatprep.subr.mxu0 0.0
    %871 = vmatpush1.msra.mxu0 0.0
    %872 = vmatprep.subr.mxu0 0.0
    %873 = vmatpush1.msra.mxu0 0.0
    %874 = vmatprep.subr.mxu0 0.0
    %875 = vmatpush1.msra.mxu0 0.0
    %876 = vmatprep.subr.mxu0 0.0
    %877 = vmatpush1.msra.mxu0 0.0
    %878 = vmatprep.subr.mxu0 0.0
    %879 = vmatpush1.msra.mxu0 0.0
    %880 = vmatprep.subr.mxu0 0.0
    %881 = vmatpush1.msra.mxu0 0.0
    %882 = vmatprep.subr.mxu0 0.0
    %883 = vmatpush1.msra.mxu0 0.0
    %884 = vmatprep.subr.mxu0 0.0
    %885 = vmatpush1.msra.mxu0 0.0
    %886 = vmatprep.subr.mxu0 0.0
    %887 = vmatpush1.msra.mxu0 0.0
    %888 = vmatprep.subr.mxu0 0.0
    %889 = vmatpush1.msra.mxu0 %v108
    %890 = vmatprep.subr.mxu0 0.0
    %891 = vmatpush1.msra.mxu0 %v107
    %892 = vmatprep.subr.mxu0 0.0
    %893 = vmatpush1.msra.mxu0 %v106
    %894 = vmatprep.subr.mxu0 0.0
    %895 = vmatpush1.msra.mxu0 %v105
    %896 = vmatprep.subr.mxu0 0.0
    %897 = vmatpush2.msra.mxu0 0.0
    %898 = vmatprep.subr.mxu0 0.0
    %899 = vmatpush2.msra.mxu0 0.0
    %900 = vmatprep.subr.mxu0 0.0
    %901 = vmatpush2.msra.mxu0 0.0
    %902 = vmatprep.subr.mxu0 0.0
    %903 = vmatpush2.msra.mxu0 0.0
    %904 = vmatprep.subr.mxu0 0.0
    %905 = vmatpush2.msra.mxu0 0.0
    %906 = vmatprep.subr.mxu0 0.0
    %907 = vmatpush2.msra.mxu0 0.0
    %908 = vmatprep.subr.mxu0 0.0
    %909 = vmatpush2.msra.mxu0 0.0
    %910 = vmatprep.subr.mxu0 0.0
    %911 = vmatpush2.msra.mxu0 0.0
    %912 = vmatprep.subr.mxu0 0.0
    %913 = vmatpush2.msra.mxu0 0.0
    %914 = vmatprep.subr.mxu0 0.0
    %915 = vmatpush2.msra.mxu0 0.0
    %916 = vmatprep.subr.mxu0 0.0
    %917 = vmatpush2.msra.mxu0 0.0
    %918 = vmatprep.subr.mxu0 0.0
    %919 = vmatpush2.msra.mxu0 0.0
    %920 = vmatprep.subr.mxu0 0.0
    %921 = vmatpush2.msra.mxu0 0.0
    %922 = vmatprep.subr.mxu0 0.0
    %923 = vmatpush2.msra.mxu0 0.0
    %924 = vmatprep.subr.mxu0 0.0
    %925 = vmatpush2.msra.mxu0 0.0
    %926 = vmatprep.subr.mxu0 0.0
    %927 = vmatpush2.msra.mxu0 0.0
    %928 = vmatprep.mubr.f32.mxu0 0.0
    %929 = vmatmul.mubr.f32.gmra.mxu0 %v862
    %v930 = vpop.f32.mrf.mxu0
    %v931 = vadd.f32 0.0, %v930
    %v932 = vpop.f32.mrf.mxu0
    %933 = vdwg.mxu0
    %v935 = vsel %vm124, %v860, 0
    %937 = vmatprep.subr.mxu0 0.0
    %938 = vmatpush1.msra.mxu0 0.0
    %939 = vmatprep.subr.mxu0 0.0
    %940 = vmatpush1.msra.mxu0 0.0
    %941 = vmatprep.subr.mxu0 0.0
    %942 = vmatpush1.msra.mxu0 0.0
    %943 = vmatprep.subr.mxu0 0.0
    %944 = vmatpush1.msra.mxu0 0.0
    %945 = vmatprep.subr.mxu0 0.0
    %946 = vmatpush1.msra.mxu0 0.0
    %947 = vmatprep.subr.mxu0 0.0
    %948 = vmatpush1.msra.mxu0 0.0
    %949 = vmatprep.subr.mxu0 0.0
    %950 = vmatpush1.msra.mxu0 0.0
    %951 = vmatprep.subr.mxu0 0.0
    %952 = vmatpush1.msra.mxu0 0.0
    %953 = vmatprep.subr.mxu0 0.0
    %954 = vmatpush1.msra.mxu0 0.0
    %955 = vmatprep.subr.mxu0 0.0
    %956 = vmatpush1.msra.mxu0 0.0
    %957 = vmatprep.subr.mxu0 0.0
    %958 = vmatpush1.msra.mxu0 0.0
    %959 = vmatprep.subr.mxu0 0.0
    %960 = vmatpush1.msra.mxu0 0.0
    %961 = vmatprep.subr.mxu0 0.0
    %962 = vmatpush1.msra.mxu0 %v104
    %963 = vmatprep.subr.mxu0 0.0
    %964 = vmatpush1.msra.mxu0 %v103
    %965 = vmatprep.subr.mxu0 0.0
    %966 = vmatpush1.msra.mxu0 %v102
    %967 = vmatprep.subr.mxu0 0.0
    %968 = vmatpush1.msra.mxu0 %v101
    %969 = vmatprep.subr.mxu0 0.0
    %970 = vmatpush2.msra.mxu0 0.0
    %971 = vmatprep.subr.mxu0 0.0
    %972 = vmatpush2.msra.mxu0 0.0
    %973 = vmatprep.subr.mxu0 0.0
    %974 = vmatpush2.msra.mxu0 0.0
    %975 = vmatprep.subr.mxu0 0.0
    %976 = vmatpush2.msra.mxu0 0.0
    %977 = vmatprep.subr.mxu0 0.0
    %978 = vmatpush2.msra.mxu0 0.0
    %979 = vmatprep.subr.mxu0 0.0
    %980 = vmatpush2.msra.mxu0 0.0
    %981 = vmatprep.subr.mxu0 0.0
    %982 = vmatpush2.msra.mxu0 0.0
    %983 = vmatprep.subr.mxu0 0.0
    %984 = vmatpush2.msra.mxu0 0.0
    %985 = vmatprep.subr.mxu0 0.0
    %986 = vmatpush2.msra.mxu0 0.0
    %987 = vmatprep.subr.mxu0 0.0
    %988 = vmatpush2.msra.mxu0 0.0
    %989 = vmatprep.subr.mxu0 0.0
    %990 = vmatpush2.msra.mxu0 0.0
    %991 = vmatprep.subr.mxu0 0.0
    %992 = vmatpush2.msra.mxu0 0.0
    %993 = vmatprep.subr.mxu0 0.0
    %994 = vmatpush2.msra.mxu0 0.0
    %995 = vmatprep.subr.mxu0 0.0
    %996 = vmatpush2.msra.mxu0 0.0
    %997 = vmatprep.subr.mxu0 0.0
    %998 = vmatpush2.msra.mxu0 0.0
    %999 = vmatprep.subr.mxu0 0.0
    %1000 = vmatpush2.msra.mxu0 0.0
    %1001 = vmatprep.mubr.f32.mxu0 0.0
    %1002 = vmatmul.mubr.f32.gmra.mxu0 %v935
    %v1003 = vpop.f32.mrf.mxu0
    %v1004 = vadd.f32 %v931, %v1003
    %v1005 = vpop.f32.mrf.mxu0
    %1006 = vdwg.mxu0
    %v1007 = vadd.f32 %v1004, %v121
    %v1008 = vtanh.pop %v1007
    %s1009 = scalar_lea.vmem [#allocation2], 6
    %v1010 = vld [vmem:[%s1009] sm:$0x3]
    %1011 = vmatprep.subr.mxu0 0.0
    %1012 = vmatpush1.msra.mxu0 0.0
    %1013 = vmatprep.subr.mxu0 0.0
    %1014 = vmatpush1.msra.mxu0 0.0
    %1015 = vmatprep.subr.mxu0 0.0
    %1016 = vmatpush1.msra.mxu0 0.0
    %1017 = vmatprep.subr.mxu0 0.0
    %1018 = vmatpush1.msra.mxu0 0.0
    %1019 = vmatprep.subr.mxu0 0.0
    %1020 = vmatpush1.msra.mxu0 0.0
    %1021 = vmatprep.subr.mxu0 0.0
    %1022 = vmatpush1.msra.mxu0 0.0
    %1023 = vmatprep.subr.mxu0 0.0
    %1024 = vmatpush1.msra.mxu0 0.0
    %1025 = vmatprep.subr.mxu0 0.0
    %1026 = vmatpush1.msra.mxu0 0.0
    %1027 = vmatprep.subr.mxu0 0.0
    %1028 = vmatpush1.msra.mxu0 0.0
    %1029 = vmatprep.subr.mxu0 0.0
    %1030 = vmatpush1.msra.mxu0 0.0
    %1031 = vmatprep.subr.mxu0 0.0
    %1032 = vmatpush1.msra.mxu0 0.0
    %1033 = vmatprep.subr.mxu0 0.0
    %1034 = vmatpush1.msra.mxu0 0.0
    %1035 = vmatprep.subr.mxu0 0.0
    %1036 = vmatpush1.msra.mxu0 %v100
    %1037 = vmatprep.subr.mxu0 0.0
    %1038 = vmatpush1.msra.mxu0 %v99
    %1039 = vmatprep.subr.mxu0 0.0
    %1040 = vmatpush1.msra.mxu0 %v98
    %1041 = vmatprep.subr.mxu0 0.0
    %1042 = vmatpush1.msra.mxu0 %v97
    %1043 = vmatprep.subr.mxu0 0.0
    %1044 = vmatpush2.msra.mxu0 0.0
    %1045 = vmatprep.subr.mxu0 0.0
    %1046 = vmatpush2.msra.mxu0 0.0
    %1047 = vmatprep.subr.mxu0 0.0
    %1048 = vmatpush2.msra.mxu0 0.0
    %1049 = vmatprep.subr.mxu0 0.0
    %1050 = vmatpush2.msra.mxu0 0.0
    %1051 = vmatprep.subr.mxu0 0.0
    %1052 = vmatpush2.msra.mxu0 0.0
    %1053 = vmatprep.subr.mxu0 0.0
    %1054 = vmatpush2.msra.mxu0 0.0
    %1055 = vmatprep.subr.mxu0 0.0
    %1056 = vmatpush2.msra.mxu0 0.0
    %1057 = vmatprep.subr.mxu0 0.0
    %1058 = vmatpush2.msra.mxu0 0.0
    %1059 = vmatprep.subr.mxu0 0.0
    %1060 = vmatpush2.msra.mxu0 0.0
    %1061 = vmatprep.subr.mxu0 0.0
    %1062 = vmatpush2.msra.mxu0 0.0
    %1063 = vmatprep.subr.mxu0 0.0
    %1064 = vmatpush2.msra.mxu0 0.0
    %1065 = vmatprep.subr.mxu0 0.0
    %1066 = vmatpush2.msra.mxu0 0.0
    %1067 = vmatprep.subr.mxu0 0.0
    %1068 = vmatpush2.msra.mxu0 0.0
    %1069 = vmatprep.subr.mxu0 0.0
    %1070 = vmatpush2.msra.mxu0 0.0
    %1071 = vmatprep.subr.mxu0 0.0
    %1072 = vmatpush2.msra.mxu0 0.0
    %1073 = vmatprep.subr.mxu0 0.0
    %1074 = vmatpush2.msra.mxu0 0.0
    %1075 = vmatprep.mubr.f32.mxu0 0.0
    %1076 = vmatmul.mubr.f32.gmra.mxu0 %v935
    %v1077 = vpop.f32.mrf.mxu0
    %v1078 = vadd.f32 0.0, %v1077
    %v1079 = vpop.f32.mrf.mxu0
    %1080 = vdwg.mxu0
    %v1082 = vsel %vm198, %v1010, 0
    %1084 = vmatprep.subr.mxu0 0.0
    %1085 = vmatpush1.msra.mxu0 0.0
    %1086 = vmatprep.subr.mxu0 0.0
    %1087 = vmatpush1.msra.mxu0 0.0
    %1088 = vmatprep.subr.mxu0 0.0
    %1089 = vmatpush1.msra.mxu0 0.0
    %1090 = vmatprep.subr.mxu0 0.0
    %1091 = vmatpush1.msra.mxu0 0.0
    %1092 = vmatprep.subr.mxu0 0.0
    %1093 = vmatpush1.msra.mxu0 0.0
    %1094 = vmatprep.subr.mxu0 0.0
    %1095 = vmatpush1.msra.mxu0 0.0
    %1096 = vmatprep.subr.mxu0 0.0
    %1097 = vmatpush1.msra.mxu0 0.0
    %1098 = vmatprep.subr.mxu0 0.0
    %1099 = vmatpush1.msra.mxu0 0.0
    %1100 = vmatprep.subr.mxu0 0.0
    %1101 = vmatpush1.msra.mxu0 0.0
    %1102 = vmatprep.subr.mxu0 0.0
    %1103 = vmatpush1.msra.mxu0 0.0
    %1104 = vmatprep.subr.mxu0 0.0
    %1105 = vmatpush1.msra.mxu0 0.0
    %1106 = vmatprep.subr.mxu0 0.0
    %1107 = vmatpush1.msra.mxu0 0.0
    %1108 = vmatprep.subr.mxu0 0.0
    %1109 = vmatpush1.msra.mxu0 0.0
    %1110 = vmatprep.subr.mxu0 0.0
    %1111 = vmatpush1.msra.mxu0 0.0
    %1112 = vmatprep.subr.mxu0 0.0
    %1113 = vmatpush1.msra.mxu0 %v96
    %1114 = vmatprep.subr.mxu0 0.0
    %1115 = vmatpush1.msra.mxu0 %v95
    %1116 = vmatprep.subr.mxu0 0.0
    %1117 = vmatpush2.msra.mxu0 0.0
    %1118 = vmatprep.subr.mxu0 0.0
    %1119 = vmatpush2.msra.mxu0 0.0
    %1120 = vmatprep.subr.mxu0 0.0
    %1121 = vmatpush2.msra.mxu0 0.0
    %1122 = vmatprep.subr.mxu0 0.0
    %1123 = vmatpush2.msra.mxu0 0.0
    %1124 = vmatprep.subr.mxu0 0.0
    %1125 = vmatpush2.msra.mxu0 0.0
    %1126 = vmatprep.subr.mxu0 0.0
    %1127 = vmatpush2.msra.mxu0 0.0
    %1128 = vmatprep.subr.mxu0 0.0
    %1129 = vmatpush2.msra.mxu0 0.0
    %1130 = vmatprep.subr.mxu0 0.0
    %1131 = vmatpush2.msra.mxu0 0.0
    %1132 = vmatprep.subr.mxu0 0.0
    %1133 = vmatpush2.msra.mxu0 0.0
    %1134 = vmatprep.subr.mxu0 0.0
    %1135 = vmatpush2.msra.mxu0 0.0
    %1136 = vmatprep.subr.mxu0 0.0
    %1137 = vmatpush2.msra.mxu0 0.0
    %1138 = vmatprep.subr.mxu0 0.0
    %1139 = vmatpush2.msra.mxu0 0.0
    %1140 = vmatprep.subr.mxu0 0.0
    %1141 = vmatpush2.msra.mxu0 0.0
    %1142 = vmatprep.subr.mxu0 0.0
    %1143 = vmatpush2.msra.mxu0 0.0
    %1144 = vmatprep.subr.mxu0 0.0
    %1145 = vmatpush2.msra.mxu0 0.0
    %1146 = vmatprep.subr.mxu0 0.0
    %1147 = vmatpush2.msra.mxu0 0.0
    %1148 = vmatprep.mubr.f32.mxu0 0.0
    %1149 = vmatmul.mubr.f32.gmra.mxu0 %v1082
    %v1150 = vpop.f32.mrf.mxu0
    %v1151 = vadd.f32 %v1078, %v1150
    %v1152 = vpop.f32.mrf.mxu0
    %1153 = vdwg.mxu0
    %v1154 = vadd.f32 %v1151, %v114
    %v1155 = vtanh.pop %v1154
    %v1157 = vsel %vm124, %v1008, 0
    %1159 = vmatprep.subr.mxu0 0.0
    %1160 = vmatpush1.msra.mxu0 0.0
    %1161 = vmatprep.subr.mxu0 0.0
    %1162 = vmatpush1.msra.mxu0 0.0
    %1163 = vmatprep.subr.mxu0 0.0
    %1164 = vmatpush1.msra.mxu0 0.0
    %1165 = vmatprep.subr.mxu0 0.0
    %1166 = vmatpush1.msra.mxu0 0.0
    %1167 = vmatprep.subr.mxu0 0.0
    %1168 = vmatpush1.msra.mxu0 0.0
    %1169 = vmatprep.subr.mxu0 0.0
    %1170 = vmatpush1.msra.mxu0 0.0
    %1171 = vmatprep.subr.mxu0 0.0
    %1172 = vmatpush1.msra.mxu0 0.0
    %1173 = vmatprep.subr.mxu0 0.0
    %1174 = vmatpush1.msra.mxu0 0.0
    %1175 = vmatprep.subr.mxu0 0.0
    %1176 = vmatpush1.msra.mxu0 0.0
    %1177 = vmatprep.subr.mxu0 0.0
    %1178 = vmatpush1.msra.mxu0 0.0
    %1179 = vmatprep.subr.mxu0 0.0
    %1180 = vmatpush1.msra.mxu0 0.0
    %1181 = vmatprep.subr.mxu0 0.0
    %1182 = vmatpush1.msra.mxu0 0.0
    %1183 = vmatprep.subr.mxu0 0.0
    %1184 = vmatpush1.msra.mxu0 %v108
    %1185 = vmatprep.subr.mxu0 0.0
    %1186 = vmatpush1.msra.mxu0 %v107
    %1187 = vmatprep.subr.mxu0 0.0
    %1188 = vmatpush1.msra.mxu0 %v106
    %1189 = vmatprep.subr.mxu0 0.0
    %1190 = vmatpush1.msra.mxu0 %v105
    %1191 = vmatprep.subr.mxu0 0.0
    %1192 = vmatpush2.msra.mxu0 0.0
    %1193 = vmatprep.subr.mxu0 0.0
    %1194 = vmatpush2.msra.mxu0 0.0
    %1195 = vmatprep.subr.mxu0 0.0
    %1196 = vmatpush2.msra.mxu0 0.0
    %1197 = vmatprep.subr.mxu0 0.0
    %1198 = vmatpush2.msra.mxu0 0.0
    %1199 = vmatprep.subr.mxu0 0.0
    %1200 = vmatpush2.msra.mxu0 0.0
    %1201 = vmatprep.subr.mxu0 0.0
    %1202 = vmatpush2.msra.mxu0 0.0
    %1203 = vmatprep.subr.mxu0 0.0
    %1204 = vmatpush2.msra.mxu0 0.0
    %1205 = vmatprep.subr.mxu0 0.0
    %1206 = vmatpush2.msra.mxu0 0.0
    %1207 = vmatprep.subr.mxu0 0.0
    %1208 = vmatpush2.msra.mxu0 0.0
    %1209 = vmatprep.subr.mxu0 0.0
    %1210 = vmatpush2.msra.mxu0 0.0
    %1211 = vmatprep.subr.mxu0 0.0
    %1212 = vmatpush2.msra.mxu0 0.0
    %1213 = vmatprep.subr.mxu0 0.0
    %1214 = vmatpush2.msra.mxu0 0.0
    %1215 = vmatprep.subr.mxu0 0.0
    %1216 = vmatpush2.msra.mxu0 0.0
    %1217 = vmatprep.subr.mxu0 0.0
    %1218 = vmatpush2.msra.mxu0 0.0
    %1219 = vmatprep.subr.mxu0 0.0
    %1220 = vmatpush2.msra.mxu0 0.0
    %1221 = vmatprep.subr.mxu0 0.0
    %1222 = vmatpush2.msra.mxu0 0.0
    %1223 = vmatprep.mubr.f32.mxu0 0.0
    %1224 = vmatmul.mubr.f32.gmra.mxu0 %v1157
    %v1225 = vpop.f32.mrf.mxu0
    %v1226 = vadd.f32 0.0, %v1225
    %v1227 = vpop.f32.mrf.mxu0
    %1228 = vdwg.mxu0
    %v1230 = vsel %vm124, %v1155, 0
    %1232 = vmatprep.subr.mxu0 0.0
    %1233 = vmatpush1.msra.mxu0 0.0
    %1234 = vmatprep.subr.mxu0 0.0
    %1235 = vmatpush1.msra.mxu0 0.0
    %1236 = vmatprep.subr.mxu0 0.0
    %1237 = vmatpush1.msra.mxu0 0.0
    %1238 = vmatprep.subr.mxu0 0.0
    %1239 = vmatpush1.msra.mxu0 0.0
    %1240 = vmatprep.subr.mxu0 0.0
    %1241 = vmatpush1.msra.mxu0 0.0
    %1242 = vmatprep.subr.mxu0 0.0
    %1243 = vmatpush1.msra.mxu0 0.0
    %1244 = vmatprep.subr.mxu0 0.0
    %1245 = vmatpush1.msra.mxu0 0.0
    %1246 = vmatprep.subr.mxu0 0.0
    %1247 = vmatpush1.msra.mxu0 0.0
    %1248 = vmatprep.subr.mxu0 0.0
    %1249 = vmatpush1.msra.mxu0 0.0
    %1250 = vmatprep.subr.mxu0 0.0
    %1251 = vmatpush1.msra.mxu0 0.0
    %1252 = vmatprep.subr.mxu0 0.0
    %1253 = vmatpush1.msra.mxu0 0.0
    %1254 = vmatprep.subr.mxu0 0.0
    %1255 = vmatpush1.msra.mxu0 0.0
    %1256 = vmatprep.subr.mxu0 0.0
    %1257 = vmatpush1.msra.mxu0 %v104
    %1258 = vmatprep.subr.mxu0 0.0
    %1259 = vmatpush1.msra.mxu0 %v103
    %1260 = vmatprep.subr.mxu0 0.0
    %1261 = vmatpush1.msra.mxu0 %v102
    %1262 = vmatprep.subr.mxu0 0.0
    %1263 = vmatpush1.msra.mxu0 %v101
    %1264 = vmatprep.subr.mxu0 0.0
    %1265 = vmatpush2.msra.mxu0 0.0
    %1266 = vmatprep.subr.mxu0 0.0
    %1267 = vmatpush2.msra.mxu0 0.0
    %1268 = vmatprep.subr.mxu0 0.0
    %1269 = vmatpush2.msra.mxu0 0.0
    %1270 = vmatprep.subr.mxu0 0.0
    %1271 = vmatpush2.msra.mxu0 0.0
    %1272 = vmatprep.subr.mxu0 0.0
    %1273 = vmatpush2.msra.mxu0 0.0
    %1274 = vmatprep.subr.mxu0 0.0
    %1275 = vmatpush2.msra.mxu0 0.0
    %1276 = vmatprep.subr.mxu0 0.0
    %1277 = vmatpush2.msra.mxu0 0.0
    %1278 = vmatprep.subr.mxu0 0.0
    %1279 = vmatpush2.msra.mxu0 0.0
    %1280 = vmatprep.subr.mxu0 0.0
    %1281 = vmatpush2.msra.mxu0 0.0
    %1282 = vmatprep.subr.mxu0 0.0
    %1283 = vmatpush2.msra.mxu0 0.0
    %1284 = vmatprep.subr.mxu0 0.0
    %1285 = vmatpush2.msra.mxu0 0.0
    %1286 = vmatprep.subr.mxu0 0.0
    %1287 = vmatpush2.msra.mxu0 0.0
    %1288 = vmatprep.subr.mxu0 0.0
    %1289 = vmatpush2.msra.mxu0 0.0
    %1290 = vmatprep.subr.mxu0 0.0
    %1291 = vmatpush2.msra.mxu0 0.0
    %1292 = vmatprep.subr.mxu0 0.0
    %1293 = vmatpush2.msra.mxu0 0.0
    %1294 = vmatprep.subr.mxu0 0.0
    %1295 = vmatpush2.msra.mxu0 0.0
    %1296 = vmatprep.mubr.f32.mxu0 0.0
    %1297 = vmatmul.mubr.f32.gmra.mxu0 %v1230
    %v1298 = vpop.f32.mrf.mxu0
    %v1299 = vadd.f32 %v1226, %v1298
    %v1300 = vpop.f32.mrf.mxu0
    %1301 = vdwg.mxu0
    %v1302 = vadd.f32 %v1299, %v121
    %v1303 = vtanh.pop %v1302
    %s1304 = scalar_lea.vmem [#allocation2], 8
    %v1305 = vld [vmem:[%s1304] sm:$0x3]
    %1306 = vmatprep.subr.mxu0 0.0
    %1307 = vmatpush1.msra.mxu0 0.0
    %1308 = vmatprep.subr.mxu0 0.0
    %1309 = vmatpush1.msra.mxu0 0.0
    %1310 = vmatprep.subr.mxu0 0.0
    %1311 = vmatpush1.msra.mxu0 0.0
    %1312 = vmatprep.subr.mxu0 0.0
    %1313 = vmatpush1.msra.mxu0 0.0
    %1314 = vmatprep.subr.mxu0 0.0
    %1315 = vmatpush1.msra.mxu0 0.0
    %1316 = vmatprep.subr.mxu0 0.0
    %1317 = vmatpush1.msra.mxu0 0.0
    %1318 = vmatprep.subr.mxu0 0.0
    %1319 = vmatpush1.msra.mxu0 0.0
    %1320 = vmatprep.subr.mxu0 0.0
    %1321 = vmatpush1.msra.mxu0 0.0
    %1322 = vmatprep.subr.mxu0 0.0
    %1323 = vmatpush1.msra.mxu0 0.0
    %1324 = vmatprep.subr.mxu0 0.0
    %1325 = vmatpush1.msra.mxu0 0.0
    %1326 = vmatprep.subr.mxu0 0.0
    %1327 = vmatpush1.msra.mxu0 0.0
    %1328 = vmatprep.subr.mxu0 0.0
    %1329 = vmatpush1.msra.mxu0 0.0
    %1330 = vmatprep.subr.mxu0 0.0
    %1331 = vmatpush1.msra.mxu0 %v100
    %1332 = vmatprep.subr.mxu0 0.0
    %1333 = vmatpush1.msra.mxu0 %v99
    %1334 = vmatprep.subr.mxu0 0.0
    %1335 = vmatpush1.msra.mxu0 %v98
    %1336 = vmatprep.subr.mxu0 0.0
    %1337 = vmatpush1.msra.mxu0 %v97
    %1338 = vmatprep.subr.mxu0 0.0
    %1339 = vmatpush2.msra.mxu0 0.0
    %1340 = vmatprep.subr.mxu0 0.0
    %1341 = vmatpush2.msra.mxu0 0.0
    %1342 = vmatprep.subr.mxu0 0.0
    %1343 = vmatpush2.msra.mxu0 0.0
    %1344 = vmatprep.subr.mxu0 0.0
    %1345 = vmatpush2.msra.mxu0 0.0
    %1346 = vmatprep.subr.mxu0 0.0
    %1347 = vmatpush2.msra.mxu0 0.0
    %1348 = vmatprep.subr.mxu0 0.0
    %1349 = vmatpush2.msra.mxu0 0.0
    %1350 = vmatprep.subr.mxu0 0.0
    %1351 = vmatpush2.msra.mxu0 0.0
    %1352 = vmatprep.subr.mxu0 0.0
    %1353 = vmatpush2.msra.mxu0 0.0
    %1354 = vmatprep.subr.mxu0 0.0
    %1355 = vmatpush2.msra.mxu0 0.0
    %1356 = vmatprep.subr.mxu0 0.0
    %1357 = vmatpush2.msra.mxu0 0.0
    %1358 = vmatprep.subr.mxu0 0.0
    %1359 = vmatpush2.msra.mxu0 0.0
    %1360 = vmatprep.subr.mxu0 0.0
    %1361 = vmatpush2.msra.mxu0 0.0
    %1362 = vmatprep.subr.mxu0 0.0
    %1363 = vmatpush2.msra.mxu0 0.0
    %1364 = vmatprep.subr.mxu0 0.0
    %1365 = vmatpush2.msra.mxu0 0.0
    %1366 = vmatprep.subr.mxu0 0.0
    %1367 = vmatpush2.msra.mxu0 0.0
    %1368 = vmatprep.subr.mxu0 0.0
    %1369 = vmatpush2.msra.mxu0 0.0
    %1370 = vmatprep.mubr.f32.mxu0 0.0
    %1371 = vmatmul.mubr.f32.gmra.mxu0 %v1230
    %v1372 = vpop.f32.mrf.mxu0
    %v1373 = vadd.f32 0.0, %v1372
    %v1374 = vpop.f32.mrf.mxu0
    %1375 = vdwg.mxu0
    %v1377 = vsel %vm198, %v1305, 0
    %1379 = vmatprep.subr.mxu0 0.0
    %1380 = vmatpush1.msra.mxu0 0.0
    %1381 = vmatprep.subr.mxu0 0.0
    %1382 = vmatpush1.msra.mxu0 0.0
    %1383 = vmatprep.subr.mxu0 0.0
    %1384 = vmatpush1.msra.mxu0 0.0
    %1385 = vmatprep.subr.mxu0 0.0
    %1386 = vmatpush1.msra.mxu0 0.0
    %1387 = vmatprep.subr.mxu0 0.0
    %1388 = vmatpush1.msra.mxu0 0.0
    %1389 = vmatprep.subr.mxu0 0.0
    %1390 = vmatpush1.msra.mxu0 0.0
    %1391 = vmatprep.subr.mxu0 0.0
    %1392 = vmatpush1.msra.mxu0 0.0
    %1393 = vmatprep.subr.mxu0 0.0
    %1394 = vmatpush1.msra.mxu0 0.0
    %1395 = vmatprep.subr.mxu0 0.0
    %1396 = vmatpush1.msra.mxu0 0.0
    %1397 = vmatprep.subr.mxu0 0.0
    %1398 = vmatpush1.msra.mxu0 0.0
    %1399 = vmatprep.subr.mxu0 0.0
    %1400 = vmatpush1.msra.mxu0 0.0
    %1401 = vmatprep.subr.mxu0 0.0
    %1402 = vmatpush1.msra.mxu0 0.0
    %1403 = vmatprep.subr.mxu0 0.0
    %1404 = vmatpush1.msra.mxu0 0.0
    %1405 = vmatprep.subr.mxu0 0.0
    %1406 = vmatpush1.msra.mxu0 0.0
    %1407 = vmatprep.subr.mxu0 0.0
    %1408 = vmatpush1.msra.mxu0 %v96
    %1409 = vmatprep.subr.mxu0 0.0
    %1410 = vmatpush1.msra.mxu0 %v95
    %1411 = vmatprep.subr.mxu0 0.0
    %1412 = vmatpush2.msra.mxu0 0.0
    %1413 = vmatprep.subr.mxu0 0.0
    %1414 = vmatpush2.msra.mxu0 0.0
    %1415 = vmatprep.subr.mxu0 0.0
    %1416 = vmatpush2.msra.mxu0 0.0
    %1417 = vmatprep.subr.mxu0 0.0
    %1418 = vmatpush2.msra.mxu0 0.0
    %1419 = vmatprep.subr.mxu0 0.0
    %1420 = vmatpush2.msra.mxu0 0.0
    %1421 = vmatprep.subr.mxu0 0.0
    %1422 = vmatpush2.msra.mxu0 0.0
    %1423 = vmatprep.subr.mxu0 0.0
    %1424 = vmatpush2.msra.mxu0 0.0
    %1425 = vmatprep.subr.mxu0 0.0
    %1426 = vmatpush2.msra.mxu0 0.0
    %1427 = vmatprep.subr.mxu0 0.0
    %1428 = vmatpush2.msra.mxu0 0.0
    %1429 = vmatprep.subr.mxu0 0.0
    %1430 = vmatpush2.msra.mxu0 0.0
    %1431 = vmatprep.subr.mxu0 0.0
    %1432 = vmatpush2.msra.mxu0 0.0
    %1433 = vmatprep.subr.mxu0 0.0
    %1434 = vmatpush2.msra.mxu0 0.0
    %1435 = vmatprep.subr.mxu0 0.0
    %1436 = vmatpush2.msra.mxu0 0.0
    %1437 = vmatprep.subr.mxu0 0.0
    %1438 = vmatpush2.msra.mxu0 0.0
    %1439 = vmatprep.subr.mxu0 0.0
    %1440 = vmatpush2.msra.mxu0 0.0
    %1441 = vmatprep.subr.mxu0 0.0
    %1442 = vmatpush2.msra.mxu0 0.0
    %1443 = vmatprep.mubr.f32.mxu0 0.0
    %1444 = vmatmul.mubr.f32.gmra.mxu0 %v1377
    %v1445 = vpop.f32.mrf.mxu0
    %v1446 = vadd.f32 %v1373, %v1445
    %v1447 = vpop.f32.mrf.mxu0
    %1448 = vdwg.mxu0
    %v1449 = vadd.f32 %v1446, %v114
    %v1450 = vtanh.pop %v1449
    %v1452 = vsel %vm124, %v1303, 0
    %1454 = vmatprep.subr.mxu0 0.0
    %1455 = vmatpush1.msra.mxu0 0.0
    %1456 = vmatprep.subr.mxu0 0.0
    %1457 = vmatpush1.msra.mxu0 0.0
    %1458 = vmatprep.subr.mxu0 0.0
    %1459 = vmatpush1.msra.mxu0 0.0
    %1460 = vmatprep.subr.mxu0 0.0
    %1461 = vmatpush1.msra.mxu0 0.0
    %1462 = vmatprep.subr.mxu0 0.0
    %1463 = vmatpush1.msra.mxu0 0.0
    %1464 = vmatprep.subr.mxu0 0.0
    %1465 = vmatpush1.msra.mxu0 0.0
    %1466 = vmatprep.subr.mxu0 0.0
    %1467 = vmatpush1.msra.mxu0 0.0
    %1468 = vmatprep.subr.mxu0 0.0
    %1469 = vmatpush1.msra.mxu0 0.0
    %1470 = vmatprep.subr.mxu0 0.0
    %1471 = vmatpush1.msra.mxu0 0.0
    %1472 = vmatprep.subr.mxu0 0.0
    %1473 = vmatpush1.msra.mxu0 0.0
    %1474 = vmatprep.subr.mxu0 0.0
    %1475 = vmatpush1.msra.mxu0 0.0
    %1476 = vmatprep.subr.mxu0 0.0
    %1477 = vmatpush1.msra.mxu0 0.0
    %1478 = vmatprep.subr.mxu0 0.0
    %1479 = vmatpush1.msra.mxu0 %v108
    %1480 = vmatprep.subr.mxu0 0.0
    %1481 = vmatpush1.msra.mxu0 %v107
    %1482 = vmatprep.subr.mxu0 0.0
    %1483 = vmatpush1.msra.mxu0 %v106
    %1484 = vmatprep.subr.mxu0 0.0
    %1485 = vmatpush1.msra.mxu0 %v105
    %1486 = vmatprep.subr.mxu0 0.0
    %1487 = vmatpush2.msra.mxu0 0.0
    %1488 = vmatprep.subr.mxu0 0.0
    %1489 = vmatpush2.msra.mxu0 0.0
    %1490 = vmatprep.subr.mxu0 0.0
    %1491 = vmatpush2.msra.mxu0 0.0
    %1492 = vmatprep.subr.mxu0 0.0
    %1493 = vmatpush2.msra.mxu0 0.0
    %1494 = vmatprep.subr.mxu0 0.0
    %1495 = vmatpush2.msra.mxu0 0.0
    %1496 = vmatprep.subr.mxu0 0.0
    %1497 = vmatpush2.msra.mxu0 0.0
    %1498 = vmatprep.subr.mxu0 0.0
    %1499 = vmatpush2.msra.mxu0 0.0
    %1500 = vmatprep.subr.mxu0 0.0
    %1501 = vmatpush2.msra.mxu0 0.0
    %1502 = vmatprep.subr.mxu0 0.0
    %1503 = vmatpush2.msra.mxu0 0.0
    %1504 = vmatprep.subr.mxu0 0.0
    %1505 = vmatpush2.msra.mxu0 0.0
    %1506 = vmatprep.subr.mxu0 0.0
    %1507 = vmatpush2.msra.mxu0 0.0
    %1508 = vmatprep.subr.mxu0 0.0
    %1509 = vmatpush2.msra.mxu0 0.0
    %1510 = vmatprep.subr.mxu0 0.0
    %1511 = vmatpush2.msra.mxu0 0.0
    %1512 = vmatprep.subr.mxu0 0.0
    %1513 = vmatpush2.msra.mxu0 0.0
    %1514 = vmatprep.subr.mxu0 0.0
    %1515 = vmatpush2.msra.mxu0 0.0
    %1516 = vmatprep.subr.mxu0 0.0
    %1517 = vmatpush2.msra.mxu0 0.0
    %1518 = vmatprep.mubr.f32.mxu0 0.0
    %1519 = vmatmul.mubr.f32.gmra.mxu0 %v1452
    %v1520 = vpop.f32.mrf.mxu0
    %v1521 = vadd.f32 0.0, %v1520
    %v1522 = vpop.f32.mrf.mxu0
    %1523 = vdwg.mxu0
    %v1525 = vsel %vm124, %v1450, 0
    %1527 = vmatprep.subr.mxu0 0.0
    %1528 = vmatpush1.msra.mxu0 0.0
    %1529 = vmatprep.subr.mxu0 0.0
    %1530 = vmatpush1.msra.mxu0 0.0
    %1531 = vmatprep.subr.mxu0 0.0
    %1532 = vmatpush1.msra.mxu0 0.0
    %1533 = vmatprep.subr.mxu0 0.0
    %1534 = vmatpush1.msra.mxu0 0.0
    %1535 = vmatprep.subr.mxu0 0.0
    %1536 = vmatpush1.msra.mxu0 0.0
    %1537 = vmatprep.subr.mxu0 0.0
    %1538 = vmatpush1.msra.mxu0 0.0
    %1539 = vmatprep.subr.mxu0 0.0
    %1540 = vmatpush1.msra.mxu0 0.0
    %1541 = vmatprep.subr.mxu0 0.0
    %1542 = vmatpush1.msra.mxu0 0.0
    %1543 = vmatprep.subr.mxu0 0.0
    %1544 = vmatpush1.msra.mxu0 0.0
    %1545 = vmatprep.subr.mxu0 0.0
    %1546 = vmatpush1.msra.mxu0 0.0
    %1547 = vmatprep.subr.mxu0 0.0
    %1548 = vmatpush1.msra.mxu0 0.0
    %1549 = vmatprep.subr.mxu0 0.0
    %1550 = vmatpush1.msra.mxu0 0.0
    %1551 = vmatprep.subr.mxu0 0.0
    %1552 = vmatpush1.msra.mxu0 %v104
    %1553 = vmatprep.subr.mxu0 0.0
    %1554 = vmatpush1.msra.mxu0 %v103
    %1555 = vmatprep.subr.mxu0 0.0
    %1556 = vmatpush1.msra.mxu0 %v102
    %1557 = vmatprep.subr.mxu0 0.0
    %1558 = vmatpush1.msra.mxu0 %v101
    %1559 = vmatprep.subr.mxu0 0.0
    %1560 = vmatpush2.msra.mxu0 0.0
    %1561 = vmatprep.subr.mxu0 0.0
    %1562 = vmatpush2.msra.mxu0 0.0
    %1563 = vmatprep.subr.mxu0 0.0
    %1564 = vmatpush2.msra.mxu0 0.0
    %1565 = vmatprep.subr.mxu0 0.0
    %1566 = vmatpush2.msra.mxu0 0.0
    %1567 = vmatprep.subr.mxu0 0.0
    %1568 = vmatpush2.msra.mxu0 0.0
    %1569 = vmatprep.subr.mxu0 0.0
    %1570 = vmatpush2.msra.mxu0 0.0
    %1571 = vmatprep.subr.mxu0 0.0
    %1572 = vmatpush2.msra.mxu0 0.0
    %1573 = vmatprep.subr.mxu0 0.0
    %1574 = vmatpush2.msra.mxu0 0.0
    %1575 = vmatprep.subr.mxu0 0.0
    %1576 = vmatpush2.msra.mxu0 0.0
    %1577 = vmatprep.subr.mxu0 0.0
    %1578 = vmatpush2.msra.mxu0 0.0
    %1579 = vmatprep.subr.mxu0 0.0
    %1580 = vmatpush2.msra.mxu0 0.0
    %1581 = vmatprep.subr.mxu0 0.0
    %1582 = vmatpush2.msra.mxu0 0.0
    %1583 = vmatprep.subr.mxu0 0.0
    %1584 = vmatpush2.msra.mxu0 0.0
    %1585 = vmatprep.subr.mxu0 0.0
    %1586 = vmatpush2.msra.mxu0 0.0
    %1587 = vmatprep.subr.mxu0 0.0
    %1588 = vmatpush2.msra.mxu0 0.0
    %1589 = vmatprep.subr.mxu0 0.0
    %1590 = vmatpush2.msra.mxu0 0.0
    %1591 = vmatprep.mubr.f32.mxu0 0.0
    %1592 = vmatmul.mubr.f32.gmra.mxu0 %v1525
    %v1593 = vpop.f32.mrf.mxu0
    %v1594 = vadd.f32 %v1521, %v1593
    %v1595 = vpop.f32.mrf.mxu0
    %1596 = vdwg.mxu0
    %v1597 = vadd.f32 %v1594, %v121
    %v1598 = vtanh.pop %v1597
    %s1599 = scalar_lea.vmem [#allocation2], 10
    %v1600 = vld [vmem:[%s1599] sm:$0x3]
    %1601 = vmatprep.subr.mxu0 0.0
    %1602 = vmatpush1.msra.mxu0 0.0
    %1603 = vmatprep.subr.mxu0 0.0
    %1604 = vmatpush1.msra.mxu0 0.0
    %1605 = vmatprep.subr.mxu0 0.0
    %1606 = vmatpush1.msra.mxu0 0.0
    %1607 = vmatprep.subr.mxu0 0.0
    %1608 = vmatpush1.msra.mxu0 0.0
    %1609 = vmatprep.subr.mxu0 0.0
    %1610 = vmatpush1.msra.mxu0 0.0
    %1611 = vmatprep.subr.mxu0 0.0
    %1612 = vmatpush1.msra.mxu0 0.0
    %1613 = vmatprep.subr.mxu0 0.0
    %1614 = vmatpush1.msra.mxu0 0.0
    %1615 = vmatprep.subr.mxu0 0.0
    %1616 = vmatpush1.msra.mxu0 0.0
    %1617 = vmatprep.subr.mxu0 0.0
    %1618 = vmatpush1.msra.mxu0 0.0
    %1619 = vmatprep.subr.mxu0 0.0
    %1620 = vmatpush1.msra.mxu0 0.0
    %1621 = vmatprep.subr.mxu0 0.0
    %1622 = vmatpush1.msra.mxu0 0.0
    %1623 = vmatprep.subr.mxu0 0.0
    %1624 = vmatpush1.msra.mxu0 0.0
    %1625 = vmatprep.subr.mxu0 0.0
    %1626 = vmatpush1.msra.mxu0 %v100
    %1627 = vmatprep.subr.mxu0 0.0
    %1628 = vmatpush1.msra.mxu0 %v99
    %1629 = vmatprep.subr.mxu0 0.0
    %1630 = vmatpush1.msra.mxu0 %v98
    %1631 = vmatprep.subr.mxu0 0.0
    %1632 = vmatpush1.msra.mxu0 %v97
    %1633 = vmatprep.subr.mxu0 0.0
    %1634 = vmatpush2.msra.mxu0 0.0
    %1635 = vmatprep.subr.mxu0 0.0
    %1636 = vmatpush2.msra.mxu0 0.0
    %1637 = vmatprep.subr.mxu0 0.0
    %1638 = vmatpush2.msra.mxu0 0.0
    %1639 = vmatprep.subr.mxu0 0.0
    %1640 = vmatpush2.msra.mxu0 0.0
    %1641 = vmatprep.subr.mxu0 0.0
    %1642 = vmatpush2.msra.mxu0 0.0
    %1643 = vmatprep.subr.mxu0 0.0
    %1644 = vmatpush2.msra.mxu0 0.0
    %1645 = vmatprep.subr.mxu0 0.0
    %1646 = vmatpush2.msra.mxu0 0.0
    %1647 = vmatprep.subr.mxu0 0.0
    %1648 = vmatpush2.msra.mxu0 0.0
    %1649 = vmatprep.subr.mxu0 0.0
    %1650 = vmatpush2.msra.mxu0 0.0
    %1651 = vmatprep.subr.mxu0 0.0
    %1652 = vmatpush2.msra.mxu0 0.0
    %1653 = vmatprep.subr.mxu0 0.0
    %1654 = vmatpush2.msra.mxu0 0.0
    %1655 = vmatprep.subr.mxu0 0.0
    %1656 = vmatpush2.msra.mxu0 0.0
    %1657 = vmatprep.subr.mxu0 0.0
    %1658 = vmatpush2.msra.mxu0 0.0
    %1659 = vmatprep.subr.mxu0 0.0
    %1660 = vmatpush2.msra.mxu0 0.0
    %1661 = vmatprep.subr.mxu0 0.0
    %1662 = vmatpush2.msra.mxu0 0.0
    %1663 = vmatprep.subr.mxu0 0.0
    %1664 = vmatpush2.msra.mxu0 0.0
    %1665 = vmatprep.mubr.f32.mxu0 0.0
    %1666 = vmatmul.mubr.f32.gmra.mxu0 %v1525
    %v1667 = vpop.f32.mrf.mxu0
    %v1668 = vadd.f32 0.0, %v1667
    %v1669 = vpop.f32.mrf.mxu0
    %1670 = vdwg.mxu0
    %v1672 = vsel %vm198, %v1600, 0
    %1674 = vmatprep.subr.mxu0 0.0
    %1675 = vmatpush1.msra.mxu0 0.0
    %1676 = vmatprep.subr.mxu0 0.0
    %1677 = vmatpush1.msra.mxu0 0.0
    %1678 = vmatprep.subr.mxu0 0.0
    %1679 = vmatpush1.msra.mxu0 0.0
    %1680 = vmatprep.subr.mxu0 0.0
    %1681 = vmatpush1.msra.mxu0 0.0
    %1682 = vmatprep.subr.mxu0 0.0
    %1683 = vmatpush1.msra.mxu0 0.0
    %1684 = vmatprep.subr.mxu0 0.0
    %1685 = vmatpush1.msra.mxu0 0.0
    %1686 = vmatprep.subr.mxu0 0.0
    %1687 = vmatpush1.msra.mxu0 0.0
    %1688 = vmatprep.subr.mxu0 0.0
    %1689 = vmatpush1.msra.mxu0 0.0
    %1690 = vmatprep.subr.mxu0 0.0
    %1691 = vmatpush1.msra.mxu0 0.0
    %1692 = vmatprep.subr.mxu0 0.0
    %1693 = vmatpush1.msra.mxu0 0.0
    %1694 = vmatprep.subr.mxu0 0.0
    %1695 = vmatpush1.msra.mxu0 0.0
    %1696 = vmatprep.subr.mxu0 0.0
    %1697 = vmatpush1.msra.mxu0 0.0
    %1698 = vmatprep.subr.mxu0 0.0
    %1699 = vmatpush1.msra.mxu0 0.0
    %1700 = vmatprep.subr.mxu0 0.0
    %1701 = vmatpush1.msra.mxu0 0.0
    %1702 = vmatprep.subr.mxu0 0.0
    %1703 = vmatpush1.msra.mxu0 %v96
    %1704 = vmatprep.subr.mxu0 0.0
    %1705 = vmatpush1.msra.mxu0 %v95
    %1706 = vmatprep.subr.mxu0 0.0
    %1707 = vmatpush2.msra.mxu0 0.0
    %1708 = vmatprep.subr.mxu0 0.0
    %1709 = vmatpush2.msra.mxu0 0.0
    %1710 = vmatprep.subr.mxu0 0.0
    %1711 = vmatpush2.msra.mxu0 0.0
    %1712 = vmatprep.subr.mxu0 0.0
    %1713 = vmatpush2.msra.mxu0 0.0
    %1714 = vmatprep.subr.mxu0 0.0
    %1715 = vmatpush2.msra.mxu0 0.0
    %1716 = vmatprep.subr.mxu0 0.0
    %1717 = vmatpush2.msra.mxu0 0.0
    %1718 = vmatprep.subr.mxu0 0.0
    %1719 = vmatpush2.msra.mxu0 0.0
    %1720 = vmatprep.subr.mxu0 0.0
    %1721 = vmatpush2.msra.mxu0 0.0
    %1722 = vmatprep.subr.mxu0 0.0
    %1723 = vmatpush2.msra.mxu0 0.0
    %1724 = vmatprep.subr.mxu0 0.0
    %1725 = vmatpush2.msra.mxu0 0.0
    %1726 = vmatprep.subr.mxu0 0.0
    %1727 = vmatpush2.msra.mxu0 0.0
    %1728 = vmatprep.subr.mxu0 0.0
    %1729 = vmatpush2.msra.mxu0 0.0
    %1730 = vmatprep.subr.mxu0 0.0
    %1731 = vmatpush2.msra.mxu0 0.0
    %1732 = vmatprep.subr.mxu0 0.0
    %1733 = vmatpush2.msra.mxu0 0.0
    %1734 = vmatprep.subr.mxu0 0.0
    %1735 = vmatpush2.msra.mxu0 0.0
    %1736 = vmatprep.subr.mxu0 0.0
    %1737 = vmatpush2.msra.mxu0 0.0
    %1738 = vmatprep.mubr.f32.mxu0 0.0
    %1739 = vmatmul.mubr.f32.gmra.mxu0 %v1672
    %v1740 = vpop.f32.mrf.mxu0
    %v1741 = vadd.f32 %v1668, %v1740
    %v1742 = vpop.f32.mrf.mxu0
    %1743 = vdwg.mxu0
    %v1744 = vadd.f32 %v1741, %v114
    %v1745 = vtanh.pop %v1744
    %v1747 = vsel %vm124, %v1598, 0
    %1749 = vmatprep.subr.mxu0 0.0
    %1750 = vmatpush1.msra.mxu0 0.0
    %1751 = vmatprep.subr.mxu0 0.0
    %1752 = vmatpush1.msra.mxu0 0.0
    %1753 = vmatprep.subr.mxu0 0.0
    %1754 = vmatpush1.msra.mxu0 0.0
    %1755 = vmatprep.subr.mxu0 0.0
    %1756 = vmatpush1.msra.mxu0 0.0
    %1757 = vmatprep.subr.mxu0 0.0
    %1758 = vmatpush1.msra.mxu0 0.0
    %1759 = vmatprep.subr.mxu0 0.0
    %1760 = vmatpush1.msra.mxu0 0.0
    %1761 = vmatprep.subr.mxu0 0.0
    %1762 = vmatpush1.msra.mxu0 0.0
    %1763 = vmatprep.subr.mxu0 0.0
    %1764 = vmatpush1.msra.mxu0 0.0
    %1765 = vmatprep.subr.mxu0 0.0
    %1766 = vmatpush1.msra.mxu0 0.0
    %1767 = vmatprep.subr.mxu0 0.0
    %1768 = vmatpush1.msra.mxu0 0.0
    %1769 = vmatprep.subr.mxu0 0.0
    %1770 = vmatpush1.msra.mxu0 0.0
    %1771 = vmatprep.subr.mxu0 0.0
    %1772 = vmatpush1.msra.mxu0 0.0
    %1773 = vmatprep.subr.mxu0 0.0
    %1774 = vmatpush1.msra.mxu0 %v108
    %1775 = vmatprep.subr.mxu0 0.0
    %1776 = vmatpush1.msra.mxu0 %v107
    %1777 = vmatprep.subr.mxu0 0.0
    %1778 = vmatpush1.msra.mxu0 %v106
    %1779 = vmatprep.subr.mxu0 0.0
    %1780 = vmatpush1.msra.mxu0 %v105
    %1781 = vmatprep.subr.mxu0 0.0
    %1782 = vmatpush2.msra.mxu0 0.0
    %1783 = vmatprep.subr.mxu0 0.0
    %1784 = vmatpush2.msra.mxu0 0.0
    %1785 = vmatprep.subr.mxu0 0.0
    %1786 = vmatpush2.msra.mxu0 0.0
    %1787 = vmatprep.subr.mxu0 0.0
    %1788 = vmatpush2.msra.mxu0 0.0
    %1789 = vmatprep.subr.mxu0 0.0
    %1790 = vmatpush2.msra.mxu0 0.0
    %1791 = vmatprep.subr.mxu0 0.0
    %1792 = vmatpush2.msra.mxu0 0.0
    %1793 = vmatprep.subr.mxu0 0.0
    %1794 = vmatpush2.msra.mxu0 0.0
    %1795 = vmatprep.subr.mxu0 0.0
    %1796 = vmatpush2.msra.mxu0 0.0
    %1797 = vmatprep.subr.mxu0 0.0
    %1798 = vmatpush2.msra.mxu0 0.0
    %1799 = vmatprep.subr.mxu0 0.0
    %1800 = vmatpush2.msra.mxu0 0.0
    %1801 = vmatprep.subr.mxu0 0.0
    %1802 = vmatpush2.msra.mxu0 0.0
    %1803 = vmatprep.subr.mxu0 0.0
    %1804 = vmatpush2.msra.mxu0 0.0
    %1805 = vmatprep.subr.mxu0 0.0
    %1806 = vmatpush2.msra.mxu0 0.0
    %1807 = vmatprep.subr.mxu0 0.0
    %1808 = vmatpush2.msra.mxu0 0.0
    %1809 = vmatprep.subr.mxu0 0.0
    %1810 = vmatpush2.msra.mxu0 0.0
    %1811 = vmatprep.subr.mxu0 0.0
    %1812 = vmatpush2.msra.mxu0 0.0
    %1813 = vmatprep.mubr.f32.mxu0 0.0
    %1814 = vmatmul.mubr.f32.gmra.mxu0 %v1747
    %v1815 = vpop.f32.mrf.mxu0
    %v1816 = vadd.f32 0.0, %v1815
    %v1817 = vpop.f32.mrf.mxu0
    %1818 = vdwg.mxu0
    %v1820 = vsel %vm124, %v1745, 0
    %1822 = vmatprep.subr.mxu0 0.0
    %1823 = vmatpush1.msra.mxu0 0.0
    %1824 = vmatprep.subr.mxu0 0.0
    %1825 = vmatpush1.msra.mxu0 0.0
    %1826 = vmatprep.subr.mxu0 0.0
    %1827 = vmatpush1.msra.mxu0 0.0
    %1828 = vmatprep.subr.mxu0 0.0
    %1829 = vmatpush1.msra.mxu0 0.0
    %1830 = vmatprep.subr.mxu0 0.0
    %1831 = vmatpush1.msra.mxu0 0.0
    %1832 = vmatprep.subr.mxu0 0.0
    %1833 = vmatpush1.msra.mxu0 0.0
    %1834 = vmatprep.subr.mxu0 0.0
    %1835 = vmatpush1.msra.mxu0 0.0
    %1836 = vmatprep.subr.mxu0 0.0
    %1837 = vmatpush1.msra.mxu0 0.0
    %1838 = vmatprep.subr.mxu0 0.0
    %1839 = vmatpush1.msra.mxu0 0.0
    %1840 = vmatprep.subr.mxu0 0.0
    %1841 = vmatpush1.msra.mxu0 0.0
    %1842 = vmatprep.subr.mxu0 0.0
    %1843 = vmatpush1.msra.mxu0 0.0
    %1844 = vmatprep.subr.mxu0 0.0
    %1845 = vmatpush1.msra.mxu0 0.0
    %1846 = vmatprep.subr.mxu0 0.0
    %1847 = vmatpush1.msra.mxu0 %v104
    %1848 = vmatprep.subr.mxu0 0.0
    %1849 = vmatpush1.msra.mxu0 %v103
    %1850 = vmatprep.subr.mxu0 0.0
    %1851 = vmatpush1.msra.mxu0 %v102
    %1852 = vmatprep.subr.mxu0 0.0
    %1853 = vmatpush1.msra.mxu0 %v101
    %1854 = vmatprep.subr.mxu0 0.0
    %1855 = vmatpush2.msra.mxu0 0.0
    %1856 = vmatprep.subr.mxu0 0.0
    %1857 = vmatpush2.msra.mxu0 0.0
    %1858 = vmatprep.subr.mxu0 0.0
    %1859 = vmatpush2.msra.mxu0 0.0
    %1860 = vmatprep.subr.mxu0 0.0
    %1861 = vmatpush2.msra.mxu0 0.0
    %1862 = vmatprep.subr.mxu0 0.0
    %1863 = vmatpush2.msra.mxu0 0.0
    %1864 = vmatprep.subr.mxu0 0.0
    %1865 = vmatpush2.msra.mxu0 0.0
    %1866 = vmatprep.subr.mxu0 0.0
    %1867 = vmatpush2.msra.mxu0 0.0
    %1868 = vmatprep.subr.mxu0 0.0
    %1869 = vmatpush2.msra.mxu0 0.0
    %1870 = vmatprep.subr.mxu0 0.0
    %1871 = vmatpush2.msra.mxu0 0.0
    %1872 = vmatprep.subr.mxu0 0.0
    %1873 = vmatpush2.msra.mxu0 0.0
    %1874 = vmatprep.subr.mxu0 0.0
    %1875 = vmatpush2.msra.mxu0 0.0
    %1876 = vmatprep.subr.mxu0 0.0
    %1877 = vmatpush2.msra.mxu0 0.0
    %1878 = vmatprep.subr.mxu0 0.0
    %1879 = vmatpush2.msra.mxu0 0.0
    %1880 = vmatprep.subr.mxu0 0.0
    %1881 = vmatpush2.msra.mxu0 0.0
    %1882 = vmatprep.subr.mxu0 0.0
    %1883 = vmatpush2.msra.mxu0 0.0
    %1884 = vmatprep.subr.mxu0 0.0
    %1885 = vmatpush2.msra.mxu0 0.0
    %1886 = vmatprep.mubr.f32.mxu0 0.0
    %1887 = vmatmul.mubr.f32.gmra.mxu0 %v1820
    %v1888 = vpop.f32.mrf.mxu0
    %v1889 = vadd.f32 %v1816, %v1888
    %v1890 = vpop.f32.mrf.mxu0
    %1891 = vdwg.mxu0
    %v1892 = vadd.f32 %v1889, %v121
    %v1893 = vtanh.pop %v1892
    %s1894 = scalar_lea.vmem [#allocation2], 12
    %v1895 = vld [vmem:[%s1894] sm:$0x3]
    %1896 = vmatprep.subr.mxu0 0.0
    %1897 = vmatpush1.msra.mxu0 0.0
    %1898 = vmatprep.subr.mxu0 0.0
    %1899 = vmatpush1.msra.mxu0 0.0
    %1900 = vmatprep.subr.mxu0 0.0
    %1901 = vmatpush1.msra.mxu0 0.0
    %1902 = vmatprep.subr.mxu0 0.0
    %1903 = vmatpush1.msra.mxu0 0.0
    %1904 = vmatprep.subr.mxu0 0.0
    %1905 = vmatpush1.msra.mxu0 0.0
    %1906 = vmatprep.subr.mxu0 0.0
    %1907 = vmatpush1.msra.mxu0 0.0
    %1908 = vmatprep.subr.mxu0 0.0
    %1909 = vmatpush1.msra.mxu0 0.0
    %1910 = vmatprep.subr.mxu0 0.0
    %1911 = vmatpush1.msra.mxu0 0.0
    %1912 = vmatprep.subr.mxu0 0.0
    %1913 = vmatpush1.msra.mxu0 0.0
    %1914 = vmatprep.subr.mxu0 0.0
    %1915 = vmatpush1.msra.mxu0 0.0
    %1916 = vmatprep.subr.mxu0 0.0
    %1917 = vmatpush1.msra.mxu0 0.0
    %1918 = vmatprep.subr.mxu0 0.0
    %1919 = vmatpush1.msra.mxu0 0.0
    %1920 = vmatprep.subr.mxu0 0.0
    %1921 = vmatpush1.msra.mxu0 %v100
    %1922 = vmatprep.subr.mxu0 0.0
    %1923 = vmatpush1.msra.mxu0 %v99
    %1924 = vmatprep.subr.mxu0 0.0
    %1925 = vmatpush1.msra.mxu0 %v98
    %1926 = vmatprep.subr.mxu0 0.0
    %1927 = vmatpush1.msra.mxu0 %v97
    %1928 = vmatprep.subr.mxu0 0.0
    %1929 = vmatpush2.msra.mxu0 0.0
    %1930 = vmatprep.subr.mxu0 0.0
    %1931 = vmatpush2.msra.mxu0 0.0
    %1932 = vmatprep.subr.mxu0 0.0
    %1933 = vmatpush2.msra.mxu0 0.0
    %1934 = vmatprep.subr.mxu0 0.0
    %1935 = vmatpush2.msra.mxu0 0.0
    %1936 = vmatprep.subr.mxu0 0.0
    %1937 = vmatpush2.msra.mxu0 0.0
    %1938 = vmatprep.subr.mxu0 0.0
    %1939 = vmatpush2.msra.mxu0 0.0
    %1940 = vmatprep.subr.mxu0 0.0
    %1941 = vmatpush2.msra.mxu0 0.0
    %1942 = vmatprep.subr.mxu0 0.0
    %1943 = vmatpush2.msra.mxu0 0.0
    %1944 = vmatprep.subr.mxu0 0.0
    %1945 = vmatpush2.msra.mxu0 0.0
    %1946 = vmatprep.subr.mxu0 0.0
    %1947 = vmatpush2.msra.mxu0 0.0
    %1948 = vmatprep.subr.mxu0 0.0
    %1949 = vmatpush2.msra.mxu0 0.0
    %1950 = vmatprep.subr.mxu0 0.0
    %1951 = vmatpush2.msra.mxu0 0.0
    %1952 = vmatprep.subr.mxu0 0.0
    %1953 = vmatpush2.msra.mxu0 0.0
    %1954 = vmatprep.subr.mxu0 0.0
    %1955 = vmatpush2.msra.mxu0 0.0
    %1956 = vmatprep.subr.mxu0 0.0
    %1957 = vmatpush2.msra.mxu0 0.0
    %1958 = vmatprep.subr.mxu0 0.0
    %1959 = vmatpush2.msra.mxu0 0.0
    %1960 = vmatprep.mubr.f32.mxu0 0.0
    %1961 = vmatmul.mubr.f32.gmra.mxu0 %v1820
    %v1962 = vpop.f32.mrf.mxu0
    %v1963 = vadd.f32 0.0, %v1962
    %v1964 = vpop.f32.mrf.mxu0
    %1965 = vdwg.mxu0
    %v1967 = vsel %vm198, %v1895, 0
    %1969 = vmatprep.subr.mxu0 0.0
    %1970 = vmatpush1.msra.mxu0 0.0
    %1971 = vmatprep.subr.mxu0 0.0
    %1972 = vmatpush1.msra.mxu0 0.0
    %1973 = vmatprep.subr.mxu0 0.0
    %1974 = vmatpush1.msra.mxu0 0.0
    %1975 = vmatprep.subr.mxu0 0.0
    %1976 = vmatpush1.msra.mxu0 0.0
    %1977 = vmatprep.subr.mxu0 0.0
    %1978 = vmatpush1.msra.mxu0 0.0
    %1979 = vmatprep.subr.mxu0 0.0
    %1980 = vmatpush1.msra.mxu0 0.0
    %1981 = vmatprep.subr.mxu0 0.0
    %1982 = vmatpush1.msra.mxu0 0.0
    %1983 = vmatprep.subr.mxu0 0.0
    %1984 = vmatpush1.msra.mxu0 0.0
    %1985 = vmatprep.subr.mxu0 0.0
    %1986 = vmatpush1.msra.mxu0 0.0
    %1987 = vmatprep.subr.mxu0 0.0
    %1988 = vmatpush1.msra.mxu0 0.0
    %1989 = vmatprep.subr.mxu0 0.0
    %1990 = vmatpush1.msra.mxu0 0.0
    %1991 = vmatprep.subr.mxu0 0.0
    %1992 = vmatpush1.msra.mxu0 0.0
    %1993 = vmatprep.subr.mxu0 0.0
    %1994 = vmatpush1.msra.mxu0 0.0
    %1995 = vmatprep.subr.mxu0 0.0
    %1996 = vmatpush1.msra.mxu0 0.0
    %1997 = vmatprep.subr.mxu0 0.0
    %1998 = vmatpush1.msra.mxu0 %v96
    %1999 = vmatprep.subr.mxu0 0.0
    %2000 = vmatpush1.msra.mxu0 %v95
    %2001 = vmatprep.subr.mxu0 0.0
    %2002 = vmatpush2.msra.mxu0 0.0
    %2003 = vmatprep.subr.mxu0 0.0
    %2004 = vmatpush2.msra.mxu0 0.0
    %2005 = vmatprep.subr.mxu0 0.0
    %2006 = vmatpush2.msra.mxu0 0.0
    %2007 = vmatprep.subr.mxu0 0.0
    %2008 = vmatpush2.msra.mxu0 0.0
    %2009 = vmatprep.subr.mxu0 0.0
    %2010 = vmatpush2.msra.mxu0 0.0
    %2011 = vmatprep.subr.mxu0 0.0
    %2012 = vmatpush2.msra.mxu0 0.0
    %2013 = vmatprep.subr.mxu0 0.0
    %2014 = vmatpush2.msra.mxu0 0.0
    %2015 = vmatprep.subr.mxu0 0.0
    %2016 = vmatpush2.msra.mxu0 0.0
    %2017 = vmatprep.subr.mxu0 0.0
    %2018 = vmatpush2.msra.mxu0 0.0
    %2019 = vmatprep.subr.mxu0 0.0
    %2020 = vmatpush2.msra.mxu0 0.0
    %2021 = vmatprep.subr.mxu0 0.0
    %2022 = vmatpush2.msra.mxu0 0.0
    %2023 = vmatprep.subr.mxu0 0.0
    %2024 = vmatpush2.msra.mxu0 0.0
    %2025 = vmatprep.subr.mxu0 0.0
    %2026 = vmatpush2.msra.mxu0 0.0
    %2027 = vmatprep.subr.mxu0 0.0
    %2028 = vmatpush2.msra.mxu0 0.0
    %2029 = vmatprep.subr.mxu0 0.0
    %2030 = vmatpush2.msra.mxu0 0.0
    %2031 = vmatprep.subr.mxu0 0.0
    %2032 = vmatpush2.msra.mxu0 0.0
    %2033 = vmatprep.mubr.f32.mxu0 0.0
    %2034 = vmatmul.mubr.f32.gmra.mxu0 %v1967
    %v2035 = vpop.f32.mrf.mxu0
    %v2036 = vadd.f32 %v1963, %v2035
    %v2037 = vpop.f32.mrf.mxu0
    %2038 = vdwg.mxu0
    %v2039 = vadd.f32 %v2036, %v114
    %v2040 = vtanh.pop %v2039
    %v2042 = vsel %vm124, %v1893, 0
    %2044 = vmatprep.subr.mxu0 0.0
    %2045 = vmatpush1.msra.mxu0 0.0
    %2046 = vmatprep.subr.mxu0 0.0
    %2047 = vmatpush1.msra.mxu0 0.0
    %2048 = vmatprep.subr.mxu0 0.0
    %2049 = vmatpush1.msra.mxu0 0.0
    %2050 = vmatprep.subr.mxu0 0.0
    %2051 = vmatpush1.msra.mxu0 0.0
    %2052 = vmatprep.subr.mxu0 0.0
    %2053 = vmatpush1.msra.mxu0 0.0
    %2054 = vmatprep.subr.mxu0 0.0
    %2055 = vmatpush1.msra.mxu0 0.0
    %2056 = vmatprep.subr.mxu0 0.0
    %2057 = vmatpush1.msra.mxu0 0.0
    %2058 = vmatprep.subr.mxu0 0.0
    %2059 = vmatpush1.msra.mxu0 0.0
    %2060 = vmatprep.subr.mxu0 0.0
    %2061 = vmatpush1.msra.mxu0 0.0
    %2062 = vmatprep.subr.mxu0 0.0
    %2063 = vmatpush1.msra.mxu0 0.0
    %2064 = vmatprep.subr.mxu0 0.0
    %2065 = vmatpush1.msra.mxu0 0.0
    %2066 = vmatprep.subr.mxu0 0.0
    %2067 = vmatpush1.msra.mxu0 0.0
    %2068 = vmatprep.subr.mxu0 0.0
    %2069 = vmatpush1.msra.mxu0 %v108
    %2070 = vmatprep.subr.mxu0 0.0
    %2071 = vmatpush1.msra.mxu0 %v107
    %2072 = vmatprep.subr.mxu0 0.0
    %2073 = vmatpush1.msra.mxu0 %v106
    %2074 = vmatprep.subr.mxu0 0.0
    %2075 = vmatpush1.msra.mxu0 %v105
    %2076 = vmatprep.subr.mxu0 0.0
    %2077 = vmatpush2.msra.mxu0 0.0
    %2078 = vmatprep.subr.mxu0 0.0
    %2079 = vmatpush2.msra.mxu0 0.0
    %2080 = vmatprep.subr.mxu0 0.0
    %2081 = vmatpush2.msra.mxu0 0.0
    %2082 = vmatprep.subr.mxu0 0.0
    %2083 = vmatpush2.msra.mxu0 0.0
    %2084 = vmatprep.subr.mxu0 0.0
    %2085 = vmatpush2.msra.mxu0 0.0
    %2086 = vmatprep.subr.mxu0 0.0
    %2087 = vmatpush2.msra.mxu0 0.0
    %2088 = vmatprep.subr.mxu0 0.0
    %2089 = vmatpush2.msra.mxu0 0.0
    %2090 = vmatprep.subr.mxu0 0.0
    %2091 = vmatpush2.msra.mxu0 0.0
    %2092 = vmatprep.subr.mxu0 0.0
    %2093 = vmatpush2.msra.mxu0 0.0
    %2094 = vmatprep.subr.mxu0 0.0
    %2095 = vmatpush2.msra.mxu0 0.0
    %2096 = vmatprep.subr.mxu0 0.0
    %2097 = vmatpush2.msra.mxu0 0.0
    %2098 = vmatprep.subr.mxu0 0.0
    %2099 = vmatpush2.msra.mxu0 0.0
    %2100 = vmatprep.subr.mxu0 0.0
    %2101 = vmatpush2.msra.mxu0 0.0
    %2102 = vmatprep.subr.mxu0 0.0
    %2103 = vmatpush2.msra.mxu0 0.0
    %2104 = vmatprep.subr.mxu0 0.0
    %2105 = vmatpush2.msra.mxu0 0.0
    %2106 = vmatprep.subr.mxu0 0.0
    %2107 = vmatpush2.msra.mxu0 0.0
    %2108 = vmatprep.mubr.f32.mxu0 0.0
    %2109 = vmatmul.mubr.f32.gmra.mxu0 %v2042
    %v2110 = vpop.f32.mrf.mxu0
    %v2111 = vadd.f32 0.0, %v2110
    %v2112 = vpop.f32.mrf.mxu0
    %2113 = vdwg.mxu0
    %v2115 = vsel %vm124, %v2040, 0
    %2117 = vmatprep.subr.mxu0 0.0
    %2118 = vmatpush1.msra.mxu0 0.0
    %2119 = vmatprep.subr.mxu0 0.0
    %2120 = vmatpush1.msra.mxu0 0.0
    %2121 = vmatprep.subr.mxu0 0.0
    %2122 = vmatpush1.msra.mxu0 0.0
    %2123 = vmatprep.subr.mxu0 0.0
    %2124 = vmatpush1.msra.mxu0 0.0
    %2125 = vmatprep.subr.mxu0 0.0
    %2126 = vmatpush1.msra.mxu0 0.0
    %2127 = vmatprep.subr.mxu0 0.0
    %2128 = vmatpush1.msra.mxu0 0.0
    %2129 = vmatprep.subr.mxu0 0.0
    %2130 = vmatpush1.msra.mxu0 0.0
    %2131 = vmatprep.subr.mxu0 0.0
    %2132 = vmatpush1.msra.mxu0 0.0
    %2133 = vmatprep.subr.mxu0 0.0
    %2134 = vmatpush1.msra.mxu0 0.0
    %2135 = vmatprep.subr.mxu0 0.0
    %2136 = vmatpush1.msra.mxu0 0.0
    %2137 = vmatprep.subr.mxu0 0.0
    %2138 = vmatpush1.msra.mxu0 0.0
    %2139 = vmatprep.subr.mxu0 0.0
    %2140 = vmatpush1.msra.mxu0 0.0
    %2141 = vmatprep.subr.mxu0 0.0
    %2142 = vmatpush1.msra.mxu0 %v104
    %2143 = vmatprep.subr.mxu0 0.0
    %2144 = vmatpush1.msra.mxu0 %v103
    %2145 = vmatprep.subr.mxu0 0.0
    %2146 = vmatpush1.msra.mxu0 %v102
    %2147 = vmatprep.subr.mxu0 0.0
    %2148 = vmatpush1.msra.mxu0 %v101
    %2149 = vmatprep.subr.mxu0 0.0
    %2150 = vmatpush2.msra.mxu0 0.0
    %2151 = vmatprep.subr.mxu0 0.0
    %2152 = vmatpush2.msra.mxu0 0.0
    %2153 = vmatprep.subr.mxu0 0.0
    %2154 = vmatpush2.msra.mxu0 0.0
    %2155 = vmatprep.subr.mxu0 0.0
    %2156 = vmatpush2.msra.mxu0 0.0
    %2157 = vmatprep.subr.mxu0 0.0
    %2158 = vmatpush2.msra.mxu0 0.0
    %2159 = vmatprep.subr.mxu0 0.0
    %2160 = vmatpush2.msra.mxu0 0.0
    %2161 = vmatprep.subr.mxu0 0.0
    %2162 = vmatpush2.msra.mxu0 0.0
    %2163 = vmatprep.subr.mxu0 0.0
    %2164 = vmatpush2.msra.mxu0 0.0
    %2165 = vmatprep.subr.mxu0 0.0
    %2166 = vmatpush2.msra.mxu0 0.0
    %2167 = vmatprep.subr.mxu0 0.0
    %2168 = vmatpush2.msra.mxu0 0.0
    %2169 = vmatprep.subr.mxu0 0.0
    %2170 = vmatpush2.msra.mxu0 0.0
    %2171 = vmatprep.subr.mxu0 0.0
    %2172 = vmatpush2.msra.mxu0 0.0
    %2173 = vmatprep.subr.mxu0 0.0
    %2174 = vmatpush2.msra.mxu0 0.0
    %2175 = vmatprep.subr.mxu0 0.0
    %2176 = vmatpush2.msra.mxu0 0.0
    %2177 = vmatprep.subr.mxu0 0.0
    %2178 = vmatpush2.msra.mxu0 0.0
    %2179 = vmatprep.subr.mxu0 0.0
    %2180 = vmatpush2.msra.mxu0 0.0
    %2181 = vmatprep.mubr.f32.mxu0 0.0
    %2182 = vmatmul.mubr.f32.gmra.mxu0 %v2115
    %v2183 = vpop.f32.mrf.mxu0
    %v2184 = vadd.f32 %v2111, %v2183
    %v2185 = vpop.f32.mrf.mxu0
    %2186 = vdwg.mxu0
    %v2187 = vadd.f32 %v2184, %v121
    %v2188 = vtanh.pop %v2187
    %s2189 = scalar_lea.vmem [#allocation2], 14
    %v2190 = vld [vmem:[%s2189] sm:$0x3]
    %2191 = vmatprep.subr.mxu0 0.0
    %2192 = vmatpush1.msra.mxu0 0.0
    %2193 = vmatprep.subr.mxu0 0.0
    %2194 = vmatpush1.msra.mxu0 0.0
    %2195 = vmatprep.subr.mxu0 0.0
    %2196 = vmatpush1.msra.mxu0 0.0
    %2197 = vmatprep.subr.mxu0 0.0
    %2198 = vmatpush1.msra.mxu0 0.0
    %2199 = vmatprep.subr.mxu0 0.0
    %2200 = vmatpush1.msra.mxu0 0.0
    %2201 = vmatprep.subr.mxu0 0.0
    %2202 = vmatpush1.msra.mxu0 0.0
    %2203 = vmatprep.subr.mxu0 0.0
    %2204 = vmatpush1.msra.mxu0 0.0
    %2205 = vmatprep.subr.mxu0 0.0
    %2206 = vmatpush1.msra.mxu0 0.0
    %2207 = vmatprep.subr.mxu0 0.0
    %2208 = vmatpush1.msra.mxu0 0.0
    %2209 = vmatprep.subr.mxu0 0.0
    %2210 = vmatpush1.msra.mxu0 0.0
    %2211 = vmatprep.subr.mxu0 0.0
    %2212 = vmatpush1.msra.mxu0 0.0
    %2213 = vmatprep.subr.mxu0 0.0
    %2214 = vmatpush1.msra.mxu0 0.0
    %2215 = vmatprep.subr.mxu0 0.0
    %2216 = vmatpush1.msra.mxu0 %v100
    %2217 = vmatprep.subr.mxu0 0.0
    %2218 = vmatpush1.msra.mxu0 %v99
    %2219 = vmatprep.subr.mxu0 0.0
    %2220 = vmatpush1.msra.mxu0 %v98
    %2221 = vmatprep.subr.mxu0 0.0
    %2222 = vmatpush1.msra.mxu0 %v97
    %2223 = vmatprep.subr.mxu0 0.0
    %2224 = vmatpush2.msra.mxu0 0.0
    %2225 = vmatprep.subr.mxu0 0.0
    %2226 = vmatpush2.msra.mxu0 0.0
    %2227 = vmatprep.subr.mxu0 0.0
    %2228 = vmatpush2.msra.mxu0 0.0
    %2229 = vmatprep.subr.mxu0 0.0
    %2230 = vmatpush2.msra.mxu0 0.0
    %2231 = vmatprep.subr.mxu0 0.0
    %2232 = vmatpush2.msra.mxu0 0.0
    %2233 = vmatprep.subr.mxu0 0.0
    %2234 = vmatpush2.msra.mxu0 0.0
    %2235 = vmatprep.subr.mxu0 0.0
    %2236 = vmatpush2.msra.mxu0 0.0
    %2237 = vmatprep.subr.mxu0 0.0
    %2238 = vmatpush2.msra.mxu0 0.0
    %2239 = vmatprep.subr.mxu0 0.0
    %2240 = vmatpush2.msra.mxu0 0.0
    %2241 = vmatprep.subr.mxu0 0.0
    %2242 = vmatpush2.msra.mxu0 0.0
    %2243 = vmatprep.subr.mxu0 0.0
    %2244 = vmatpush2.msra.mxu0 0.0
    %2245 = vmatprep.subr.mxu0 0.0
    %2246 = vmatpush2.msra.mxu0 0.0
    %2247 = vmatprep.subr.mxu0 0.0
    %2248 = vmatpush2.msra.mxu0 0.0
    %2249 = vmatprep.subr.mxu0 0.0
    %2250 = vmatpush2.msra.mxu0 0.0
    %2251 = vmatprep.subr.mxu0 0.0
    %2252 = vmatpush2.msra.mxu0 0.0
    %2253 = vmatprep.subr.mxu0 0.0
    %2254 = vmatpush2.msra.mxu0 0.0
    %2255 = vmatprep.mubr.f32.mxu0 0.0
    %2256 = vmatmul.mubr.f32.gmra.mxu0 %v2115
    %v2257 = vpop.f32.mrf.mxu0
    %v2258 = vadd.f32 0.0, %v2257
    %v2259 = vpop.f32.mrf.mxu0
    %2260 = vdwg.mxu0
    %v2262 = vsel %vm198, %v2190, 0
    %2264 = vmatprep.subr.mxu0 0.0
    %2265 = vmatpush1.msra.mxu0 0.0
    %2266 = vmatprep.subr.mxu0 0.0
    %2267 = vmatpush1.msra.mxu0 0.0
    %2268 = vmatprep.subr.mxu0 0.0
    %2269 = vmatpush1.msra.mxu0 0.0
    %2270 = vmatprep.subr.mxu0 0.0
    %2271 = vmatpush1.msra.mxu0 0.0
    %2272 = vmatprep.subr.mxu0 0.0
    %2273 = vmatpush1.msra.mxu0 0.0
    %2274 = vmatprep.subr.mxu0 0.0
    %2275 = vmatpush1.msra.mxu0 0.0
    %2276 = vmatprep.subr.mxu0 0.0
    %2277 = vmatpush1.msra.mxu0 0.0
    %2278 = vmatprep.subr.mxu0 0.0
    %2279 = vmatpush1.msra.mxu0 0.0
    %2280 = vmatprep.subr.mxu0 0.0
    %2281 = vmatpush1.msra.mxu0 0.0
    %2282 = vmatprep.subr.mxu0 0.0
    %2283 = vmatpush1.msra.mxu0 0.0
    %2284 = vmatprep.subr.mxu0 0.0
    %2285 = vmatpush1.msra.mxu0 0.0
    %2286 = vmatprep.subr.mxu0 0.0
    %2287 = vmatpush1.msra.mxu0 0.0
    %2288 = vmatprep.subr.mxu0 0.0
    %2289 = vmatpush1.msra.mxu0 0.0
    %2290 = vmatprep.subr.mxu0 0.0
    %2291 = vmatpush1.msra.mxu0 0.0
    %2292 = vmatprep.subr.mxu0 0.0
    %2293 = vmatpush1.msra.mxu0 %v96
    %2294 = vmatprep.subr.mxu0 0.0
    %2295 = vmatpush1.msra.mxu0 %v95
    %2296 = vmatprep.subr.mxu0 0.0
    %2297 = vmatpush2.msra.mxu0 0.0
    %2298 = vmatprep.subr.mxu0 0.0
    %2299 = vmatpush2.msra.mxu0 0.0
    %2300 = vmatprep.subr.mxu0 0.0
    %2301 = vmatpush2.msra.mxu0 0.0
    %2302 = vmatprep.subr.mxu0 0.0
    %2303 = vmatpush2.msra.mxu0 0.0
    %2304 = vmatprep.subr.mxu0 0.0
    %2305 = vmatpush2.msra.mxu0 0.0
    %2306 = vmatprep.subr.mxu0 0.0
    %2307 = vmatpush2.msra.mxu0 0.0
    %2308 = vmatprep.subr.mxu0 0.0
    %2309 = vmatpush2.msra.mxu0 0.0
    %2310 = vmatprep.subr.mxu0 0.0
    %2311 = vmatpush2.msra.mxu0 0.0
    %2312 = vmatprep.subr.mxu0 0.0
    %2313 = vmatpush2.msra.mxu0 0.0
    %2314 = vmatprep.subr.mxu0 0.0
    %2315 = vmatpush2.msra.mxu0 0.0
    %2316 = vmatprep.subr.mxu0 0.0
    %2317 = vmatpush2.msra.mxu0 0.0
    %2318 = vmatprep.subr.mxu0 0.0
    %2319 = vmatpush2.msra.mxu0 0.0
    %2320 = vmatprep.subr.mxu0 0.0
    %2321 = vmatpush2.msra.mxu0 0.0
    %2322 = vmatprep.subr.mxu0 0.0
    %2323 = vmatpush2.msra.mxu0 0.0
    %2324 = vmatprep.subr.mxu0 0.0
    %2325 = vmatpush2.msra.mxu0 0.0
    %2326 = vmatprep.subr.mxu0 0.0
    %2327 = vmatpush2.msra.mxu0 0.0
    %2328 = vmatprep.mubr.f32.mxu0 0.0
    %2329 = vmatmul.mubr.f32.gmra.mxu0 %v2262
    %v2330 = vpop.f32.mrf.mxu0
    %v2331 = vadd.f32 %v2258, %v2330
    %v2332 = vpop.f32.mrf.mxu0
    %2333 = vdwg.mxu0
    %v2334 = vadd.f32 %v2331, %v114
    %v2335 = vtanh.pop %v2334
    %v2337 = vsel %vm124, %v2188, 0
    %2339 = vmatprep.subr.mxu0 0.0
    %2340 = vmatpush1.msra.mxu0 0.0
    %2341 = vmatprep.subr.mxu0 0.0
    %2342 = vmatpush1.msra.mxu0 0.0
    %2343 = vmatprep.subr.mxu0 0.0
    %2344 = vmatpush1.msra.mxu0 0.0
    %2345 = vmatprep.subr.mxu0 0.0
    %2346 = vmatpush1.msra.mxu0 0.0
    %2347 = vmatprep.subr.mxu0 0.0
    %2348 = vmatpush1.msra.mxu0 0.0
    %2349 = vmatprep.subr.mxu0 0.0
    %2350 = vmatpush1.msra.mxu0 0.0
    %2351 = vmatprep.subr.mxu0 0.0
    %2352 = vmatpush1.msra.mxu0 0.0
    %2353 = vmatprep.subr.mxu0 0.0
    %2354 = vmatpush1.msra.mxu0 0.0
    %2355 = vmatprep.subr.mxu0 0.0
    %2356 = vmatpush1.msra.mxu0 0.0
    %2357 = vmatprep.subr.mxu0 0.0
    %2358 = vmatpush1.msra.mxu0 0.0
    %2359 = vmatprep.subr.mxu0 0.0
    %2360 = vmatpush1.msra.mxu0 0.0
    %2361 = vmatprep.subr.mxu0 0.0
    %2362 = vmatpush1.msra.mxu0 0.0
    %2363 = vmatprep.subr.mxu0 0.0
    %2364 = vmatpush1.msra.mxu0 %v108
    %2365 = vmatprep.subr.mxu0 0.0
    %2366 = vmatpush1.msra.mxu0 %v107
    %2367 = vmatprep.subr.mxu0 0.0
    %2368 = vmatpush1.msra.mxu0 %v106
    %2369 = vmatprep.subr.mxu0 0.0
    %2370 = vmatpush1.msra.mxu0 %v105
    %2371 = vmatprep.subr.mxu0 0.0
    %2372 = vmatpush2.msra.mxu0 0.0
    %2373 = vmatprep.subr.mxu0 0.0
    %2374 = vmatpush2.msra.mxu0 0.0
    %2375 = vmatprep.subr.mxu0 0.0
    %2376 = vmatpush2.msra.mxu0 0.0
    %2377 = vmatprep.subr.mxu0 0.0
    %2378 = vmatpush2.msra.mxu0 0.0
    %2379 = vmatprep.subr.mxu0 0.0
    %2380 = vmatpush2.msra.mxu0 0.0
    %2381 = vmatprep.subr.mxu0 0.0
    %2382 = vmatpush2.msra.mxu0 0.0
    %2383 = vmatprep.subr.mxu0 0.0
    %2384 = vmatpush2.msra.mxu0 0.0
    %2385 = vmatprep.subr.mxu0 0.0
    %2386 = vmatpush2.msra.mxu0 0.0
    %2387 = vmatprep.subr.mxu0 0.0
    %2388 = vmatpush2.msra.mxu0 0.0
    %2389 = vmatprep.subr.mxu0 0.0
    %2390 = vmatpush2.msra.mxu0 0.0
    %2391 = vmatprep.subr.mxu0 0.0
    %2392 = vmatpush2.msra.mxu0 0.0
    %2393 = vmatprep.subr.mxu0 0.0
    %2394 = vmatpush2.msra.mxu0 0.0
    %2395 = vmatprep.subr.mxu0 0.0
    %2396 = vmatpush2.msra.mxu0 0.0
    %2397 = vmatprep.subr.mxu0 0.0
    %2398 = vmatpush2.msra.mxu0 0.0
    %2399 = vmatprep.subr.mxu0 0.0
    %2400 = vmatpush2.msra.mxu0 0.0
    %2401 = vmatprep.subr.mxu0 0.0
    %2402 = vmatpush2.msra.mxu0 0.0
    %2403 = vmatprep.mubr.f32.mxu0 0.0
    %2404 = vmatmul.mubr.f32.gmra.mxu0 %v2337
    %v2405 = vpop.f32.mrf.mxu0
    %v2406 = vadd.f32 0.0, %v2405
    %v2407 = vpop.f32.mrf.mxu0
    %2408 = vdwg.mxu0
    %v2410 = vsel %vm124, %v2335, 0
    %2412 = vmatprep.subr.mxu0 0.0
    %2413 = vmatpush1.msra.mxu0 0.0
    %2414 = vmatprep.subr.mxu0 0.0
    %2415 = vmatpush1.msra.mxu0 0.0
    %2416 = vmatprep.subr.mxu0 0.0
    %2417 = vmatpush1.msra.mxu0 0.0
    %2418 = vmatprep.subr.mxu0 0.0
    %2419 = vmatpush1.msra.mxu0 0.0
    %2420 = vmatprep.subr.mxu0 0.0
    %2421 = vmatpush1.msra.mxu0 0.0
    %2422 = vmatprep.subr.mxu0 0.0
    %2423 = vmatpush1.msra.mxu0 0.0
    %2424 = vmatprep.subr.mxu0 0.0
    %2425 = vmatpush1.msra.mxu0 0.0
    %2426 = vmatprep.subr.mxu0 0.0
    %2427 = vmatpush1.msra.mxu0 0.0
    %2428 = vmatprep.subr.mxu0 0.0
    %2429 = vmatpush1.msra.mxu0 0.0
    %2430 = vmatprep.subr.mxu0 0.0
    %2431 = vmatpush1.msra.mxu0 0.0
    %2432 = vmatprep.subr.mxu0 0.0
    %2433 = vmatpush1.msra.mxu0 0.0
    %2434 = vmatprep.subr.mxu0 0.0
    %2435 = vmatpush1.msra.mxu0 0.0
    %2436 = vmatprep.subr.mxu0 0.0
    %2437 = vmatpush1.msra.mxu0 %v104
    %2438 = vmatprep.subr.mxu0 0.0
    %2439 = vmatpush1.msra.mxu0 %v103
    %2440 = vmatprep.subr.mxu0 0.0
    %2441 = vmatpush1.msra.mxu0 %v102
    %2442 = vmatprep.subr.mxu0 0.0
    %2443 = vmatpush1.msra.mxu0 %v101
    %2444 = vmatprep.subr.mxu0 0.0
    %2445 = vmatpush2.msra.mxu0 0.0
    %2446 = vmatprep.subr.mxu0 0.0
    %2447 = vmatpush2.msra.mxu0 0.0
    %2448 = vmatprep.subr.mxu0 0.0
    %2449 = vmatpush2.msra.mxu0 0.0
    %2450 = vmatprep.subr.mxu0 0.0
    %2451 = vmatpush2.msra.mxu0 0.0
    %2452 = vmatprep.subr.mxu0 0.0
    %2453 = vmatpush2.msra.mxu0 0.0
    %2454 = vmatprep.subr.mxu0 0.0
    %2455 = vmatpush2.msra.mxu0 0.0
    %2456 = vmatprep.subr.mxu0 0.0
    %2457 = vmatpush2.msra.mxu0 0.0
    %2458 = vmatprep.subr.mxu0 0.0
    %2459 = vmatpush2.msra.mxu0 0.0
    %2460 = vmatprep.subr.mxu0 0.0
    %2461 = vmatpush2.msra.mxu0 0.0
    %2462 = vmatprep.subr.mxu0 0.0
    %2463 = vmatpush2.msra.mxu0 0.0
    %2464 = vmatprep.subr.mxu0 0.0
    %2465 = vmatpush2.msra.mxu0 0.0
    %2466 = vmatprep.subr.mxu0 0.0
    %2467 = vmatpush2.msra.mxu0 0.0
    %2468 = vmatprep.subr.mxu0 0.0
    %2469 = vmatpush2.msra.mxu0 0.0
    %2470 = vmatprep.subr.mxu0 0.0
    %2471 = vmatpush2.msra.mxu0 0.0
    %2472 = vmatprep.subr.mxu0 0.0
    %2473 = vmatpush2.msra.mxu0 0.0
    %2474 = vmatprep.subr.mxu0 0.0
    %2475 = vmatpush2.msra.mxu0 0.0
    %2476 = vmatprep.mubr.f32.mxu0 0.0
    %2477 = vmatmul.mubr.f32.gmra.mxu0 %v2410
    %v2478 = vpop.f32.mrf.mxu0
    %v2479 = vadd.f32 %v2406, %v2478
    %v2480 = vpop.f32.mrf.mxu0
    %2481 = vdwg.mxu0
    %v2482 = vadd.f32 %v2479, %v121
    %v2483 = vtanh.pop %v2482
    %vm2484 = vcmask 254976
    %2485 = vst.msk [vmem:[#allocation11] sm:$0x3] %vm2484, %v2483
    // Predicated region
    $region50: #{tpu_custom_call.1} parent=1 // pred_check
      _
    $region51: #{tpu_custom_call.1} parent=1 // pred_check_branch
      %2487 = sbr.rel (0) target = $region53
    $region52: #{tpu_custom_call.1} parent=1 // pred_region
      %s2489 = ssub.s32 32, 32
      %2490 = vsyncadd [#allocation4], %s2489
      %s2492 = sshll.u32 [#allocation11], 4
      %s2493 = int_to_ptr.vmem [resolvable:$true] %s2492
      %2495 = dma.vmem_to_hbm [thread:$0]  %s2493, 32, %s7, [#allocation4]
    $region53: #{tpu_custom_call.1} parent=1 // pred_fallthru
      _
    // Predicated region
    $region54: #{tpu_custom_call.1} parent=1 // pred_check
      _
    $region55: #{tpu_custom_call.1} parent=1 // pred_check_branch
      %2497 = sbr.rel (0) target = $region57
    $region56: #{tpu_custom_call.1} parent=1 // pred_region
      %2498 = dma.done [#allocation4], 32
    $region57: #{tpu_custom_call.1} parent=1 // pred_fallthru
      _
    %2499 = vsyncpa [#allocation3], 1
    %2500 = vsyncpa [#allocation6], 1
    %2501 = vsyncpa [#allocation9], 1
    %2502 = vsyncpa [#allocation4], 1

</llo_original>
